<compile_context>
chip_gen: v5e
topology: v5e:2x2
jax: 0.10.0
libtpu: 0.0.40
codegen_flags: <defaults>
</compile_context>

<pallas_src>
import jax
import jax.numpy as jnp
from jax.experimental import pallas as pl
from jax.experimental.pallas import tpu as pltpu


# ----------------------------------------------------------------------------
# Kernel
# ----------------------------------------------------------------------------
def birnn_kernel(
    x_ref,      # (S, Bp, 2E)  time-major [x_t | x_{S-1-t}] slab
    wih_ref,    # (2E, 2H)     block-diag [Wih_f^T 0; 0 Wih_b^T]
    bih_ref,    # (1, 2H)      fused biases [b_f | b_b]
    whh_ref,    # (2H, 2H)     block-diag [Whh_f^T 0; 0 Whh_b^T]
    w1r_ref,    # (S, 2H, 128) linear1 weight^T, rearranged per fused step
    b1_ref,     # (1, 128)
    w2_ref,     # (128, 128)   linear2 weight^T zero-padded to 128 cols
    b2_ref,     # (1, 128)     linear2 bias zero-padded
    out_ref,    # (Bp, 128)    padded logits (lane-dense store)
):
    S, Bp, E2 = x_ref.shape
    H2 = whh_ref.shape[0]

    # --- input projections for BOTH directions: one (S*Bp, 2E)@(2E, 2H) op,
    #     biases folded in here (not re-added every step). -------------------
    x = x_ref[...].reshape(S * Bp, E2)
    xp = (jnp.dot(x, wih_ref[...], preferred_element_type=jnp.float32)
          + bih_ref[...]).reshape(S, Bp, H2)

    whh = whh_ref[...]

    # --- fused bidirectional recurrence.  State h = [h_fwd(t=i) | h_bwd(t=S-1-i)].
    #     Initial hidden state is zero, so step 0 skips the h @ Whh matmul. ---
    h = jnp.tanh(xp[0])
    # linear1 accumulated per step (no (B, S*2H) concat / big K=2048 matmul).
    y1 = jnp.dot(h, w1r_ref[0], preferred_element_type=jnp.float32)
    for i in range(1, S):
        h = jnp.tanh(xp[i] + jnp.dot(h, whh, preferred_element_type=jnp.float32))
        y1 = y1 + jnp.dot(h, w1r_ref[i], preferred_element_type=jnp.float32)

    # --- linear1 bias + tanh, padded linear2, lane-dense store ---------------
    y1 = jnp.tanh(y1 + b1_ref[...])
    out_ref[...] = (jnp.dot(y1, w2_ref[...], preferred_element_type=jnp.float32)
                    + b2_ref[...]).astype(out_ref.dtype)


# ----------------------------------------------------------------------------
# Wrapper
# ----------------------------------------------------------------------------
def birnn_forward(text, params):
    """text: (B, S) int32 token ids -> (B, 30) logits."""
    emb = params["embedding"]                # (V, E)
    x = emb[text].astype(jnp.float32)        # gather glue, (B, S, E)
    B, S, E = x.shape
    H = params["whh_f"].shape[0]
    n_cls = params["b2"].shape[0]
    Bp = ((B + 7) // 8) * 8                  # pad batch to f32 sublane count
    NP = 128                                 # lane-dense padded output width

    # [x_t | x_{S-1-t}] so a single block-diag matmul handles both directions.
    x_cat = jnp.concatenate([x, x[:, ::-1, :]], axis=-1)       # (B, S, 2E)
    x_cat = jnp.pad(x_cat, ((0, Bp - B), (0, 0), (0, 0)))      # (Bp, S, 2E)
    x_tm = jnp.transpose(x_cat, (1, 0, 2))                     # (S, Bp, 2E)

    # block-diagonal input weight (2E, 2H) + fused biases (1, 2H)
    wih_blk = jnp.zeros((2 * E, 2 * H), jnp.float32)
    wih_blk = wih_blk.at[:E, :H].set(params["wih_f"].T)
    wih_blk = wih_blk.at[E:, H:].set(params["wih_b"].T)
    b_cat = jnp.concatenate(
        [params["bih_f"] + params["bhh_f"], params["bih_b"] + params["bhh_b"]]
    ).reshape(1, 2 * H)

    # block-diagonal hidden weight (2H, 2H) — off-diagonal blocks exact zeros.
    whh_blk = jnp.zeros((2 * H, 2 * H), jnp.float32)
    whh_blk = whh_blk.at[:H, :H].set(params["whh_f"].T)
    whh_blk = whh_blk.at[H:, H:].set(params["whh_b"].T)

    # linear1 weight^T rows come ordered [t0_f, t0_b, t1_f, t1_b, ...].
    # Fused step i consumes fwd time i and bwd time S-1-i.
    w1T = params["w1"].T.reshape(S, 2, H, -1)                   # (S, dir, H, 128)
    w1r = jnp.concatenate([w1T[:, 0], w1T[:, 1][::-1]], axis=1) # (S, 2H, 128)
    b1 = params["b1"].reshape(1, -1)

    # pad linear2 to 128 output columns -> unmasked store in the kernel.
    w2p = jnp.zeros((params["w2"].shape[1], NP), jnp.float32).at[:, :n_cls].set(
        params["w2"].T)
    b2p = jnp.zeros((1, NP), jnp.float32).at[:, :n_cls].set(params["b2"])

    args = (x_tm, wih_blk, b_cat, whh_blk, w1r, b1, w2p, b2p)
    vmem = pl.BlockSpec(memory_space=pltpu.MemorySpace.VMEM)
    out = pl.pallas_call(
        birnn_kernel,
        out_shape=jax.ShapeDtypeStruct((Bp, NP), jnp.float32),
        in_specs=[vmem] * len(args),
        out_specs=vmem,
    )(*args)
    return out[:B, :n_cls]


# ----------------------------------------------------------------------------
# Pure-JAX reference (sanity check, mirrors the PyTorch module)
# ----------------------------------------------------------------------------
def birnn_reference(text, params):
    x = params["embedding"][text]
    B, S, E = x.shape
    H = params["whh_f"].shape[0]
    h = jnp.zeros((B, H), jnp.float32)
    fwd = []
    for t in range(S):
        h = jnp.tanh(x[:, t] @ params["wih_f"].T + params["bih_f"]
                     + h @ params["whh_f"].T + params["bhh_f"])
        fwd.append(h)
    h = jnp.zeros((B, H), jnp.float32)
    bwd = [None] * S
    for t in range(S - 1, -1, -1):
        h = jnp.tanh(x[:, t] @ params["wih_b"].T + params["bih_b"]
                     + h @ params["whh_b"].T + params["bhh_b"])
        bwd[t] = h
    out = jnp.stack([jnp.concatenate([fwd[t], bwd[t]], -1) for t in range(S)], axis=1)
    flat = out.reshape(B, -1)
    y1 = jnp.tanh(flat @ params["w1"].T + params["b1"])
    return y1 @ params["w2"].T + params["b2"]


# ----------------------------------------------------------------------------
# Main
# ----------------------------------------------------------------------------
if __name__ == "__main__":
    B = 2            # batch
    S = 8            # sentence_len
    E = 64           # glove embedding dim
    H = 128          # rnn hidden size
    V = 50 + 2       # vocab (glove rows + 2 appended rows, as in the module)
    N_CLS = 30

    key = jax.random.PRNGKey(0)
    ks = jax.random.split(key, 14)

    def init(k, shape, scale=0.1):
        return (scale * jax.random.normal(k, shape)).astype(jnp.float32)

    params = {
        "embedding": init(ks[0], (V, E), 1.0),
        "wih_f": init(ks[1], (H, E)),
        "whh_f": init(ks[2], (H, H)),
        "bih_f": init(ks[3], (H,)),
        "bhh_f": init(ks[4], (H,)),
        "wih_b": init(ks[5], (H, E)),
        "whh_b": init(ks[6], (H, H)),
        "bih_b": init(ks[7], (H,)),
        "bhh_b": init(ks[8], (H,)),
        "w1": init(ks[9], (128, 2 * H * S)),
        "b1": init(ks[10], (128,)),
        "w2": init(ks[11], (N_CLS, 128)),
        "b2": init(ks[12], (N_CLS,)),
    }

    text = jax.random.randint(ks[13], (B, S), 0, V, dtype=jnp.int32)

    out = birnn_forward(text, params)
    out = jax.block_until_ready(out)

    ref = birnn_reference(text, params)
    assert out.shape == (B, N_CLS)
    assert jnp.allclose(out, ref, atol=1e-4, rtol=1e-4), "mismatch vs reference"

    print("KERNEL_OK")
</pallas_src>

<mosaic_0001>
module attributes {stable_mosaic.version = 11 : i64} {
  func.func @birnn_kernel(%arg0: memref<8x8x128xf32, #tpu.memory_space<vmem>>, %arg1: memref<128x256xf32, #tpu.memory_space<vmem>>, %arg2: memref<1x256xf32, #tpu.memory_space<vmem>>, %arg3: memref<256x256xf32, #tpu.memory_space<vmem>>, %arg4: memref<8x256x128xf32, #tpu.memory_space<vmem>>, %arg5: memref<1x128xf32, #tpu.memory_space<vmem>>, %arg6: memref<128x128xf32, #tpu.memory_space<vmem>>, %arg7: memref<1x128xf32, #tpu.memory_space<vmem>>, %arg8: memref<8x128xf32, #tpu.memory_space<vmem>>) attributes {dimension_semantics = [], scalar_prefetch = 0 : i64, scratch_operands = 0 : i64, tpu.core_type = #tpu.core_type<tc>} {
    %c0 = arith.constant 0 : index
    %c0_0 = arith.constant 0 : index
    %c0_1 = arith.constant 0 : index
    %0 = vector.load %arg0[%c0, %c0_0, %c0_1] : memref<8x8x128xf32, #tpu.memory_space<vmem>>, vector<8x8x128xf32>
    %1 = vector.shape_cast %0 : vector<8x8x128xf32> to vector<64x128xf32>
    %c0_2 = arith.constant 0 : index
    %c0_3 = arith.constant 0 : index
    %2 = vector.load %arg1[%c0_2, %c0_3] : memref<128x256xf32, #tpu.memory_space<vmem>>, vector<128x256xf32>
    %cst = arith.constant dense<0.000000e+00> : vector<64x256xf32>
    %3 = tpu.matmul %1, %2, %cst {dimension_numbers = #tpu.dot_dimension_numbers<[1], [0], [0], [1], [0, 0, 1, 1], [], []>} : vector<64x128xf32>, vector<128x256xf32>, vector<64x256xf32> -> vector<64x256xf32>
    %c0_4 = arith.constant 0 : index
    %c0_5 = arith.constant 0 : index
    %4 = vector.load %arg2[%c0_4, %c0_5] : memref<1x256xf32, #tpu.memory_space<vmem>>, vector<1x256xf32>
    %5 = vector.broadcast %4 : vector<1x256xf32> to vector<64x256xf32>
    %6 = arith.addf %3, %5 : vector<64x256xf32>
    %7 = vector.shape_cast %6 : vector<64x256xf32> to vector<8x8x256xf32>
    %c0_6 = arith.constant 0 : index
    %c0_7 = arith.constant 0 : index
    %8 = vector.load %arg3[%c0_6, %c0_7] : memref<256x256xf32, #tpu.memory_space<vmem>>, vector<256x256xf32>
    %9 = vector.extract_strided_slice %7 {offsets = [0, 0, 0], sizes = [1, 8, 256], strides = [1, 1, 1]} : vector<8x8x256xf32> to vector<1x8x256xf32>
    %10 = vector.shape_cast %9 : vector<1x8x256xf32> to vector<8x256xf32>
    %11 = math.tanh %10 : vector<8x256xf32>
    %c0_8 = arith.constant 0 : index
    %c0_9 = arith.constant 0 : index
    %c0_10 = arith.constant 0 : index
    %12 = vector.load %arg4[%c0_8, %c0_9, %c0_10] : memref<8x256x128xf32, #tpu.memory_space<vmem>>, vector<1x256x128xf32>
    %13 = vector.shape_cast %12 : vector<1x256x128xf32> to vector<256x128xf32>
    %cst_11 = arith.constant dense<0.000000e+00> : vector<8x128xf32>
    %14 = tpu.matmul %11, %13, %cst_11 {dimension_numbers = #tpu.dot_dimension_numbers<[1], [0], [0], [1], [0, 0, 1, 1], [], []>} : vector<8x256xf32>, vector<256x128xf32>, vector<8x128xf32> -> vector<8x128xf32>
    %15 = vector.extract_strided_slice %7 {offsets = [1, 0, 0], sizes = [1, 8, 256], strides = [1, 1, 1]} : vector<8x8x256xf32> to vector<1x8x256xf32>
    %16 = vector.shape_cast %15 : vector<1x8x256xf32> to vector<8x256xf32>
    %cst_12 = arith.constant dense<0.000000e+00> : vector<8x256xf32>
    %17 = tpu.matmul %11, %8, %cst_12 {dimension_numbers = #tpu.dot_dimension_numbers<[1], [0], [0], [1], [0, 0, 1, 1], [], []>} : vector<8x256xf32>, vector<256x256xf32>, vector<8x256xf32> -> vector<8x256xf32>
    %18 = arith.addf %16, %17 : vector<8x256xf32>
    %19 = math.tanh %18 : vector<8x256xf32>
    %c1 = arith.constant 1 : index
    %c0_13 = arith.constant 0 : index
    %c0_14 = arith.constant 0 : index
    %20 = vector.load %arg4[%c1, %c0_13, %c0_14] : memref<8x256x128xf32, #tpu.memory_space<vmem>>, vector<1x256x128xf32>
    %21 = vector.shape_cast %20 : vector<1x256x128xf32> to vector<256x128xf32>
    %cst_15 = arith.constant dense<0.000000e+00> : vector<8x128xf32>
    %22 = tpu.matmul %19, %21, %cst_15 {dimension_numbers = #tpu.dot_dimension_numbers<[1], [0], [0], [1], [0, 0, 1, 1], [], []>} : vector<8x256xf32>, vector<256x128xf32>, vector<8x128xf32> -> vector<8x128xf32>
    %23 = arith.addf %14, %22 : vector<8x128xf32>
    %24 = vector.extract_strided_slice %7 {offsets = [2, 0, 0], sizes = [1, 8, 256], strides = [1, 1, 1]} : vector<8x8x256xf32> to vector<1x8x256xf32>
    %25 = vector.shape_cast %24 : vector<1x8x256xf32> to vector<8x256xf32>
    %cst_16 = arith.constant dense<0.000000e+00> : vector<8x256xf32>
    %26 = tpu.matmul %19, %8, %cst_16 {dimension_numbers = #tpu.dot_dimension_numbers<[1], [0], [0], [1], [0, 0, 1, 1], [], []>} : vector<8x256xf32>, vector<256x256xf32>, vector<8x256xf32> -> vector<8x256xf32>
    %27 = arith.addf %25, %26 : vector<8x256xf32>
    %28 = math.tanh %27 : vector<8x256xf32>
    %c2 = arith.constant 2 : index
    %c0_17 = arith.constant 0 : index
    %c0_18 = arith.constant 0 : index
    %29 = vector.load %arg4[%c2, %c0_17, %c0_18] : memref<8x256x128xf32, #tpu.memory_space<vmem>>, vector<1x256x128xf32>
    %30 = vector.shape_cast %29 : vector<1x256x128xf32> to vector<256x128xf32>
    %cst_19 = arith.constant dense<0.000000e+00> : vector<8x128xf32>
    %31 = tpu.matmul %28, %30, %cst_19 {dimension_numbers = #tpu.dot_dimension_numbers<[1], [0], [0], [1], [0, 0, 1, 1], [], []>} : vector<8x256xf32>, vector<256x128xf32>, vector<8x128xf32> -> vector<8x128xf32>
    %32 = arith.addf %23, %31 : vector<8x128xf32>
    %33 = vector.extract_strided_slice %7 {offsets = [3, 0, 0], sizes = [1, 8, 256], strides = [1, 1, 1]} : vector<8x8x256xf32> to vector<1x8x256xf32>
    %34 = vector.shape_cast %33 : vector<1x8x256xf32> to vector<8x256xf32>
    %cst_20 = arith.constant dense<0.000000e+00> : vector<8x256xf32>
    %35 = tpu.matmul %28, %8, %cst_20 {dimension_numbers = #tpu.dot_dimension_numbers<[1], [0], [0], [1], [0, 0, 1, 1], [], []>} : vector<8x256xf32>, vector<256x256xf32>, vector<8x256xf32> -> vector<8x256xf32>
    %36 = arith.addf %34, %35 : vector<8x256xf32>
    %37 = math.tanh %36 : vector<8x256xf32>
    %c3 = arith.constant 3 : index
    %c0_21 = arith.constant 0 : index
    %c0_22 = arith.constant 0 : index
    %38 = vector.load %arg4[%c3, %c0_21, %c0_22] : memref<8x256x128xf32, #tpu.memory_space<vmem>>, vector<1x256x128xf32>
    %39 = vector.shape_cast %38 : vector<1x256x128xf32> to vector<256x128xf32>
    %cst_23 = arith.constant dense<0.000000e+00> : vector<8x128xf32>
    %40 = tpu.matmul %37, %39, %cst_23 {dimension_numbers = #tpu.dot_dimension_numbers<[1], [0], [0], [1], [0, 0, 1, 1], [], []>} : vector<8x256xf32>, vector<256x128xf32>, vector<8x128xf32> -> vector<8x128xf32>
    %41 = arith.addf %32, %40 : vector<8x128xf32>
    %42 = vector.extract_strided_slice %7 {offsets = [4, 0, 0], sizes = [1, 8, 256], strides = [1, 1, 1]} : vector<8x8x256xf32> to vector<1x8x256xf32>
    %43 = vector.shape_cast %42 : vector<1x8x256xf32> to vector<8x256xf32>
    %cst_24 = arith.constant dense<0.000000e+00> : vector<8x256xf32>
    %44 = tpu.matmul %37, %8, %cst_24 {dimension_numbers = #tpu.dot_dimension_numbers<[1], [0], [0], [1], [0, 0, 1, 1], [], []>} : vector<8x256xf32>, vector<256x256xf32>, vector<8x256xf32> -> vector<8x256xf32>
    %45 = arith.addf %43, %44 : vector<8x256xf32>
    %46 = math.tanh %45 : vector<8x256xf32>
    %c4 = arith.constant 4 : index
    %c0_25 = arith.constant 0 : index
    %c0_26 = arith.constant 0 : index
    %47 = vector.load %arg4[%c4, %c0_25, %c0_26] : memref<8x256x128xf32, #tpu.memory_space<vmem>>, vector<1x256x128xf32>
    %48 = vector.shape_cast %47 : vector<1x256x128xf32> to vector<256x128xf32>
    %cst_27 = arith.constant dense<0.000000e+00> : vector<8x128xf32>
    %49 = tpu.matmul %46, %48, %cst_27 {dimension_numbers = #tpu.dot_dimension_numbers<[1], [0], [0], [1], [0, 0, 1, 1], [], []>} : vector<8x256xf32>, vector<256x128xf32>, vector<8x128xf32> -> vector<8x128xf32>
    %50 = arith.addf %41, %49 : vector<8x128xf32>
    %51 = vector.extract_strided_slice %7 {offsets = [5, 0, 0], sizes = [1, 8, 256], strides = [1, 1, 1]} : vector<8x8x256xf32> to vector<1x8x256xf32>
    %52 = vector.shape_cast %51 : vector<1x8x256xf32> to vector<8x256xf32>
    %cst_28 = arith.constant dense<0.000000e+00> : vector<8x256xf32>
    %53 = tpu.matmul %46, %8, %cst_28 {dimension_numbers = #tpu.dot_dimension_numbers<[1], [0], [0], [1], [0, 0, 1, 1], [], []>} : vector<8x256xf32>, vector<256x256xf32>, vector<8x256xf32> -> vector<8x256xf32>
    %54 = arith.addf %52, %53 : vector<8x256xf32>
    %55 = math.tanh %54 : vector<8x256xf32>
    %c5 = arith.constant 5 : index
    %c0_29 = arith.constant 0 : index
    %c0_30 = arith.constant 0 : index
    %56 = vector.load %arg4[%c5, %c0_29, %c0_30] : memref<8x256x128xf32, #tpu.memory_space<vmem>>, vector<1x256x128xf32>
    %57 = vector.shape_cast %56 : vector<1x256x128xf32> to vector<256x128xf32>
    %cst_31 = arith.constant dense<0.000000e+00> : vector<8x128xf32>
    %58 = tpu.matmul %55, %57, %cst_31 {dimension_numbers = #tpu.dot_dimension_numbers<[1], [0], [0], [1], [0, 0, 1, 1], [], []>} : vector<8x256xf32>, vector<256x128xf32>, vector<8x128xf32> -> vector<8x128xf32>
    %59 = arith.addf %50, %58 : vector<8x128xf32>
    %60 = vector.extract_strided_slice %7 {offsets = [6, 0, 0], sizes = [1, 8, 256], strides = [1, 1, 1]} : vector<8x8x256xf32> to vector<1x8x256xf32>
    %61 = vector.shape_cast %60 : vector<1x8x256xf32> to vector<8x256xf32>
    %cst_32 = arith.constant dense<0.000000e+00> : vector<8x256xf32>
    %62 = tpu.matmul %55, %8, %cst_32 {dimension_numbers = #tpu.dot_dimension_numbers<[1], [0], [0], [1], [0, 0, 1, 1], [], []>} : vector<8x256xf32>, vector<256x256xf32>, vector<8x256xf32> -> vector<8x256xf32>
    %63 = arith.addf %61, %62 : vector<8x256xf32>
    %64 = math.tanh %63 : vector<8x256xf32>
    %c6 = arith.constant 6 : index
    %c0_33 = arith.constant 0 : index
    %c0_34 = arith.constant 0 : index
    %65 = vector.load %arg4[%c6, %c0_33, %c0_34] : memref<8x256x128xf32, #tpu.memory_space<vmem>>, vector<1x256x128xf32>
    %66 = vector.shape_cast %65 : vector<1x256x128xf32> to vector<256x128xf32>
    %cst_35 = arith.constant dense<0.000000e+00> : vector<8x128xf32>
    %67 = tpu.matmul %64, %66, %cst_35 {dimension_numbers = #tpu.dot_dimension_numbers<[1], [0], [0], [1], [0, 0, 1, 1], [], []>} : vector<8x256xf32>, vector<256x128xf32>, vector<8x128xf32> -> vector<8x128xf32>
    %68 = arith.addf %59, %67 : vector<8x128xf32>
    %69 = vector.extract_strided_slice %7 {offsets = [7, 0, 0], sizes = [1, 8, 256], strides = [1, 1, 1]} : vector<8x8x256xf32> to vector<1x8x256xf32>
    %70 = vector.shape_cast %69 : vector<1x8x256xf32> to vector<8x256xf32>
    %cst_36 = arith.constant dense<0.000000e+00> : vector<8x256xf32>
    %71 = tpu.matmul %64, %8, %cst_36 {dimension_numbers = #tpu.dot_dimension_numbers<[1], [0], [0], [1], [0, 0, 1, 1], [], []>} : vector<8x256xf32>, vector<256x256xf32>, vector<8x256xf32> -> vector<8x256xf32>
    %72 = arith.addf %70, %71 : vector<8x256xf32>
    %73 = math.tanh %72 : vector<8x256xf32>
    %c7 = arith.constant 7 : index
    %c0_37 = arith.constant 0 : index
    %c0_38 = arith.constant 0 : index
    %74 = vector.load %arg4[%c7, %c0_37, %c0_38] : memref<8x256x128xf32, #tpu.memory_space<vmem>>, vector<1x256x128xf32>
    %75 = vector.shape_cast %74 : vector<1x256x128xf32> to vector<256x128xf32>
    %cst_39 = arith.constant dense<0.000000e+00> : vector<8x128xf32>
    %76 = tpu.matmul %73, %75, %cst_39 {dimension_numbers = #tpu.dot_dimension_numbers<[1], [0], [0], [1], [0, 0, 1, 1], [], []>} : vector<8x256xf32>, vector<256x128xf32>, vector<8x128xf32> -> vector<8x128xf32>
    %77 = arith.addf %68, %76 : vector<8x128xf32>
    %c0_40 = arith.constant 0 : index
    %c0_41 = arith.constant 0 : index
    %78 = vector.load %arg5[%c0_40, %c0_41] : memref<1x128xf32, #tpu.memory_space<vmem>>, vector<1x128xf32>
    %79 = vector.broadcast %78 : vector<1x128xf32> to vector<8x128xf32>
    %80 = arith.addf %77, %79 : vector<8x128xf32>
    %81 = math.tanh %80 : vector<8x128xf32>
    %c0_42 = arith.constant 0 : index
    %c0_43 = arith.constant 0 : index
    %82 = vector.load %arg6[%c0_42, %c0_43] : memref<128x128xf32, #tpu.memory_space<vmem>>, vector<128x128xf32>
    %cst_44 = arith.constant dense<0.000000e+00> : vector<8x128xf32>
    %83 = tpu.matmul %81, %82, %cst_44 {dimension_numbers = #tpu.dot_dimension_numbers<[1], [0], [0], [1], [0, 0, 1, 1], [], []>} : vector<8x128xf32>, vector<128x128xf32>, vector<8x128xf32> -> vector<8x128xf32>
    %c0_45 = arith.constant 0 : index
    %c0_46 = arith.constant 0 : index
    %84 = vector.load %arg7[%c0_45, %c0_46] : memref<1x128xf32, #tpu.memory_space<vmem>>, vector<1x128xf32>
    %85 = vector.broadcast %84 : vector<1x128xf32> to vector<8x128xf32>
    %86 = arith.addf %83, %85 : vector<8x128xf32>
    %c0_47 = arith.constant 0 : index
    %c0_48 = arith.constant 0 : index
    %87 = vector.load %arg8[%c0_47, %c0_48] : memref<8x128xf32, #tpu.memory_space<vmem>>, vector<8x128xf32>
    tpu.vector_store %arg8[%c0_47, %c0_48], %86 {strides = array<i32>} : memref<8x128xf32, #tpu.memory_space<vmem>>, vector<8x128xf32>,
    return
  }
}

</mosaic_0001>

<llo_original>
// kernel: tpu_custom_call.1
$region0: #{tpu_custom_call.1}
  #allocation0 [shape = 'u32[]', space=smem, size = 0x4, offset = 0x4, fixed_abs, tag = 'smem constant byte address 0x4 - core index']
  #allocation1 [shape = 'u32[72,128]{1,0:T(1,128)}', space=vmem, size = 0x9000, scoped, tag = 'internal scratch']
  %s0 = inlined_call_operand.hbm [shape: f32[8,8,128], index: 0, kind: input, shape index: {}]
  %s1 = inlined_call_operand.hbm [shape: f32[128,256], index: 1, kind: input, shape index: {}]
  %s2 = inlined_call_operand.hbm [shape: f32[1,256], index: 2, kind: input, shape index: {}]
  %s3 = inlined_call_operand.hbm [shape: f32[256,256], index: 3, kind: input, shape index: {}]
  %s4 = inlined_call_operand.hbm [shape: f32[8,256,128], index: 4, kind: input, shape index: {}]
  %s5 = inlined_call_operand.vmem [shape: f32[1,128], index: 5, kind: input, shape index: {}]
  %s6 = inlined_call_operand.hbm [shape: f32[128,128], index: 6, kind: input, shape index: {}]
  %s7 = inlined_call_operand.vmem [shape: f32[1,128], index: 7, kind: input, shape index: {}]
  %s8 = inlined_call_operand.hbm [shape: f32[8,128], index: 8, kind: output, shape index: {}]
  %s9 = sld [smem:[#allocation0]]
  $region66: #{tpu_custom_call.1} parent=0
    _
  %s11 = ssub.s32 1, %s9
  %s12 = scalar_select 0, %s11, %s9
  $region1: #{tpu_custom_call.1} parent=0
    #allocation2 [shape = 'u8[32768]{0}', space=vmem, size = 0x8000, scoped, tag = 'input window, operand 0, single buffered']
    #allocation3 [shape = 's32[1]{0}', space=sflag, size = 0x4, scoped, tag = 'scoped memory for tpu_custom_call.1']
    #allocation4 [shape = 's32[1]{0}', space=sflag, size = 0x4, scoped, tag = 'scoped memory for tpu_custom_call.1']
    #allocation5 [shape = 'u8[131072]{0}', space=vmem, size = 0x20000, scoped, tag = 'input window, operand 1, single buffered']
    #allocation6 [shape = 's32[1]{0}', space=sflag, size = 0x4, scoped, tag = 'scoped memory for tpu_custom_call.1']
    #allocation7 [shape = 'u8[1024]{0}', space=vmem, size = 0x400, scoped, tag = 'input window, operand 2, single buffered']
    #allocation8 [shape = 'u8[262144]{0}', space=vmem, size = 0x40000, scoped, tag = 'input window, operand 3, single buffered']
    #allocation9 [shape = 's32[1]{0}', space=sflag, size = 0x4, scoped, tag = 'scoped memory for tpu_custom_call.1']
    #allocation10 [shape = 'u8[1048576]{0}', space=vmem, size = 0x100000, scoped, tag = 'input window, operand 4, single buffered']
    #allocation11 [shape = 'u8[65536]{0}', space=vmem, size = 0x10000, scoped, tag = 'input window, operand 6, single buffered']
    #allocation12 [shape = 's32[1]{0}', space=sflag, size = 0x4, scoped, tag = 'scoped memory for tpu_custom_call.1']
    #allocation13 [shape = 'u8[4096]{0}', space=vmem, size = 0x1000, scoped, tag = 'output window, operand 0, single buffered']
    %13 = vsyncpa [#allocation3], 0
    %14 = vsyncpa [#allocation6], 0
    %15 = vsyncpa [#allocation9], 0
    %16 = vsyncpa [#allocation12], 0
    %17 = vsyncpa [#allocation4], 0
    // Predicated region
    $region2: #{tpu_custom_call.1} parent=1 // pred_check
      _
    $region3: #{tpu_custom_call.1} parent=1 // pred_check_branch
      %19 = sbr.rel (0) target = $region5
    $region4: #{tpu_custom_call.1} parent=1 // pred_region
      %21 = vsyncadd [#allocation3], 0
      %s22 = sshll.u32 %s0, 4
      %s23 = int_to_ptr.hbm [resolvable:$true] %s22
      %s24 = sshll.u32 [#allocation2], 4
      %s25 = int_to_ptr.vmem [resolvable:$true] %s24
      %30 = dma.hbm_to_vmem [thread:$0]  %s23, 1024, %s25, [#allocation3], 128, 128, 8
    $region5: #{tpu_custom_call.1} parent=1 // pred_fallthru
      _
    // Predicated region
    $region6: #{tpu_custom_call.1} parent=1 // pred_check
      _
    $region7: #{tpu_custom_call.1} parent=1 // pred_check_branch
      %32 = sbr.rel (0) target = $region9
    $region8: #{tpu_custom_call.1} parent=1 // pred_region
      %34 = vsyncadd [#allocation6], 0
      %s35 = sshll.u32 %s1, 4
      %s36 = int_to_ptr.hbm [resolvable:$true] %s35
      %s37 = sshll.u32 [#allocation5], 4
      %s38 = int_to_ptr.vmem [resolvable:$true] %s37
      %43 = dma.hbm_to_vmem [thread:$0]  %s36, 4096, %s38, [#allocation6], 256, 256, 16
    $region9: #{tpu_custom_call.1} parent=1 // pred_fallthru
      _
    // Predicated region
    $region10: #{tpu_custom_call.1} parent=1 // pred_check
      _
    $region11: #{tpu_custom_call.1} parent=1 // pred_check_branch
      %45 = sbr.rel (0) target = $region13
    $region12: #{tpu_custom_call.1} parent=1 // pred_region
      %47 = vsyncadd [#allocation6], 0
      %s49 = sshll.u32 %s2, 4
      %s50 = int_to_ptr.hbm [resolvable:$true] %s49
      %s51 = sshll.u32 [#allocation7], 4
      %s52 = int_to_ptr.vmem [resolvable:$true] %s51
      %54 = dma.hbm_to_vmem [thread:$0]  %s50, 32, %s52, [#allocation6]
    $region13: #{tpu_custom_call.1} parent=1 // pred_fallthru
      _
    // Predicated region
    $region14: #{tpu_custom_call.1} parent=1 // pred_check
      _
    $region15: #{tpu_custom_call.1} parent=1 // pred_check_branch
      %56 = sbr.rel (0) target = $region17
    $region16: #{tpu_custom_call.1} parent=1 // pred_region
      %58 = vsyncadd [#allocation9], 0
      %s59 = sshll.u32 %s3, 4
      %s60 = int_to_ptr.hbm [resolvable:$true] %s59
      %s61 = sshll.u32 [#allocation8], 4
      %s62 = int_to_ptr.vmem [resolvable:$true] %s61
      %67 = dma.hbm_to_vmem [thread:$0]  %s60, 8192, %s62, [#allocation9], 256, 256, 16
    $region17: #{tpu_custom_call.1} parent=1 // pred_fallthru
      _
    // Predicated region
    $region18: #{tpu_custom_call.1} parent=1 // pred_check
      _
    $region19: #{tpu_custom_call.1} parent=1 // pred_check_branch
      %69 = sbr.rel (0) target = $region21
    $region20: #{tpu_custom_call.1} parent=1 // pred_region
      %71 = vsyncadd [#allocation9], 0
      %s72 = sshll.u32 %s4, 4
      %s73 = int_to_ptr.hbm [resolvable:$true] %s72
      %s74 = sshll.u32 [#allocation10], 4
      %s75 = int_to_ptr.vmem [resolvable:$true] %s74
      %80 = dma.hbm_to_vmem [thread:$0]  %s73, 32768, %s75, [#allocation9], 128, 128, 8
    $region21: #{tpu_custom_call.1} parent=1 // pred_fallthru
      _
    // Predicated region
    $region22: #{tpu_custom_call.1} parent=1 // pred_check
      _
    $region23: #{tpu_custom_call.1} parent=1 // pred_check_branch
      %82 = sbr.rel (0) target = $region25
    $region24: #{tpu_custom_call.1} parent=1 // pred_region
      _
    $region25: #{tpu_custom_call.1} parent=1 // pred_fallthru
      _
    // Predicated region
    $region26: #{tpu_custom_call.1} parent=1 // pred_check
      _
    $region27: #{tpu_custom_call.1} parent=1 // pred_check_branch
      %84 = sbr.rel (0) target = $region29
    $region28: #{tpu_custom_call.1} parent=1 // pred_region
      %86 = vsyncadd [#allocation12], 0
      %s87 = sshll.u32 %s6, 4
      %s88 = int_to_ptr.hbm [resolvable:$true] %s87
      %s89 = sshll.u32 [#allocation11], 4
      %s90 = int_to_ptr.vmem [resolvable:$true] %s89
      %95 = dma.hbm_to_vmem [thread:$0]  %s88, 2048, %s90, [#allocation12], 128, 128, 8
    $region29: #{tpu_custom_call.1} parent=1 // pred_fallthru
      _
    // Predicated region
    $region30: #{tpu_custom_call.1} parent=1 // pred_check
      _
    $region31: #{tpu_custom_call.1} parent=1 // pred_check_branch
      %97 = sbr.rel (0) target = $region33
    $region32: #{tpu_custom_call.1} parent=1 // pred_region
      _
    $region33: #{tpu_custom_call.1} parent=1 // pred_fallthru
      _
    // Predicated region
    $region34: #{tpu_custom_call.1} parent=1 // pred_check
      _
    $region35: #{tpu_custom_call.1} parent=1 // pred_check_branch
      %99 = sbr.rel (0) target = $region37
    $region36: #{tpu_custom_call.1} parent=1 // pred_region
      %101 = dma.done [#allocation3], 1024
    $region37: #{tpu_custom_call.1} parent=1 // pred_fallthru
      _
    // Predicated region
    $region38: #{tpu_custom_call.1} parent=1 // pred_check
      _
    $region39: #{tpu_custom_call.1} parent=1 // pred_check_branch
      %103 = sbr.rel (0) target = $region41
    $region40: #{tpu_custom_call.1} parent=1 // pred_region
      %105 = dma.done [#allocation6], 4096
    $region41: #{tpu_custom_call.1} parent=1 // pred_fallthru
      _
    // Predicated region
    $region42: #{tpu_custom_call.1} parent=1 // pred_check
      _
    $region43: #{tpu_custom_call.1} parent=1 // pred_check_branch
      %107 = sbr.rel (0) target = $region45
    $region44: #{tpu_custom_call.1} parent=1 // pred_region
      %109 = dma.done [#allocation6], 32
    $region45: #{tpu_custom_call.1} parent=1 // pred_fallthru
      _
    // Predicated region
    $region46: #{tpu_custom_call.1} parent=1 // pred_check
      _
    $region47: #{tpu_custom_call.1} parent=1 // pred_check_branch
      %111 = sbr.rel (0) target = $region49
    $region48: #{tpu_custom_call.1} parent=1 // pred_region
      %113 = dma.done [#allocation9], 8192
    $region49: #{tpu_custom_call.1} parent=1 // pred_fallthru
      _
    // Predicated region
    $region50: #{tpu_custom_call.1} parent=1 // pred_check
      _
    $region51: #{tpu_custom_call.1} parent=1 // pred_check_branch
      %115 = sbr.rel (0) target = $region53
    $region52: #{tpu_custom_call.1} parent=1 // pred_region
      %117 = dma.done [#allocation9], 32768
    $region53: #{tpu_custom_call.1} parent=1 // pred_fallthru
      _
    // Predicated region
    $region54: #{tpu_custom_call.1} parent=1 // pred_check
      _
    $region55: #{tpu_custom_call.1} parent=1 // pred_check_branch
      %119 = sbr.rel (0) target = $region57
    $region56: #{tpu_custom_call.1} parent=1 // pred_region
      %121 = dma.done [#allocation12], 2048
    $region57: #{tpu_custom_call.1} parent=1 // pred_fallthru
      _
    %v122 = vld [vmem:[#allocation2] sm:$0xff]
    %v123 = vld [vmem:[#allocation2 + $0x8] sm:$0xff]
    %v124 = vld [vmem:[#allocation2 + $0x10] sm:$0xff]
    %v125 = vld [vmem:[#allocation2 + $0x18] sm:$0xff]
    %v126 = vld [vmem:[#allocation2 + $0x20] sm:$0xff]
    %v127 = vld [vmem:[#allocation2 + $0x28] sm:$0xff]
    %v128 = vld [vmem:[#allocation2 + $0x30] sm:$0xff]
    %v129 = vld [vmem:[#allocation2 + $0x38] sm:$0xff]
    %v130 = vld [vmem:[#allocation5] sm:$0xff]
    %v131 = vld [vmem:[#allocation5 + $0x8] sm:$0xff]
    %v132 = vld [vmem:[#allocation5 + $0x10] sm:$0xff]
    %v133 = vld [vmem:[#allocation5 + $0x18] sm:$0xff]
    %v134 = vld [vmem:[#allocation5 + $0x20] sm:$0xff]
    %v135 = vld [vmem:[#allocation5 + $0x28] sm:$0xff]
    %v136 = vld [vmem:[#allocation5 + $0x30] sm:$0xff]
    %v137 = vld [vmem:[#allocation5 + $0x38] sm:$0xff]
    %v138 = vld [vmem:[#allocation5 + $0x40] sm:$0xff]
    %v139 = vld [vmem:[#allocation5 + $0x48] sm:$0xff]
    %v140 = vld [vmem:[#allocation5 + $0x50] sm:$0xff]
    %v141 = vld [vmem:[#allocation5 + $0x58] sm:$0xff]
    %v142 = vld [vmem:[#allocation5 + $0x60] sm:$0xff]
    %v143 = vld [vmem:[#allocation5 + $0x68] sm:$0xff]
    %v144 = vld [vmem:[#allocation5 + $0x70] sm:$0xff]
    %v145 = vld [vmem:[#allocation5 + $0x78] sm:$0xff]
    %v146 = vld [vmem:[#allocation5 + $0x80] sm:$0xff]
    %v147 = vld [vmem:[#allocation5 + $0x88] sm:$0xff]
    %v148 = vld [vmem:[#allocation5 + $0x90] sm:$0xff]
    %v149 = vld [vmem:[#allocation5 + $0x98] sm:$0xff]
    %v150 = vld [vmem:[#allocation5 + $0xa0] sm:$0xff]
    %v151 = vld [vmem:[#allocation5 + $0xa8] sm:$0xff]
    %v152 = vld [vmem:[#allocation5 + $0xb0] sm:$0xff]
    %v153 = vld [vmem:[#allocation5 + $0xb8] sm:$0xff]
    %v154 = vld [vmem:[#allocation5 + $0xc0] sm:$0xff]
    %v155 = vld [vmem:[#allocation5 + $0xc8] sm:$0xff]
    %v156 = vld [vmem:[#allocation5 + $0xd0] sm:$0xff]
    %v157 = vld [vmem:[#allocation5 + $0xd8] sm:$0xff]
    %v158 = vld [vmem:[#allocation5 + $0xe0] sm:$0xff]
    %v159 = vld [vmem:[#allocation5 + $0xe8] sm:$0xff]
    %v160 = vld [vmem:[#allocation5 + $0xf0] sm:$0xff]
    %v161 = vld [vmem:[#allocation5 + $0xf8] sm:$0xff]
    %v162 = vld [vmem:[#allocation7] sm:$0x3]
    %v164 = vperm.slane %v162, 0
    %v165 = vperm.slane %v162, 1
    %168 = vmatpush.msra.mxu0 %v160
    %169 = vmatpush.msra.mxu0 %v158
    %170 = vmatpush.msra.mxu0 %v156
    %171 = vmatpush.msra.mxu0 %v154
    %172 = vmatpush.msra.mxu0 %v152
    %173 = vmatpush.msra.mxu0 %v150
    %174 = vmatpush.msra.mxu0 %v148
    %175 = vmatpush.msra.mxu0 %v146
    %176 = vmatpush.msra.mxu0 %v144
    %177 = vmatpush.msra.mxu0 %v142
    %178 = vmatpush.msra.mxu0 %v140
    %179 = vmatpush.msra.mxu0 %v138
    %180 = vmatpush.msra.mxu0 %v136
    %181 = vmatpush.msra.mxu0 %v134
    %182 = vmatpush.msra.mxu0 %v132
    %183 = vmatpush.msra.mxu0 %v130
    %184 = vmatmul.f32.gmra.mxu0 %v122
    %v185 = vpop.f32.mrf.mxu0
    %v186 = vadd.f32 %v164, %v185
    %187 = vmatmul.f32.gmra.mxu0 %v123
    %v188 = vpop.f32.mrf.mxu0
    %v189 = vadd.f32 %v164, %v188
    %190 = vmatmul.f32.gmra.mxu0 %v124
    %v191 = vpop.f32.mrf.mxu0
    %v192 = vadd.f32 %v164, %v191
    %193 = vmatmul.f32.gmra.mxu0 %v125
    %v194 = vpop.f32.mrf.mxu0
    %v195 = vadd.f32 %v164, %v194
    %196 = vmatmul.f32.gmra.mxu0 %v126
    %v197 = vpop.f32.mrf.mxu0
    %v198 = vadd.f32 %v164, %v197
    %199 = vmatmul.f32.gmra.mxu0 %v127
    %v200 = vpop.f32.mrf.mxu0
    %v201 = vadd.f32 %v164, %v200
    %202 = vmatmul.f32.gmra.mxu0 %v128
    %v203 = vpop.f32.mrf.mxu0
    %v204 = vadd.f32 %v164, %v203
    %205 = vmatmul.f32.gmra.mxu0 %v129
    %v206 = vpop.f32.mrf.mxu0
    %v207 = vadd.f32 %v164, %v206
    %208 = vdwg.mxu0
    %209 = vmatpush.msra.mxu0 %v161
    %210 = vmatpush.msra.mxu0 %v159
    %211 = vmatpush.msra.mxu0 %v157
    %212 = vmatpush.msra.mxu0 %v155
    %213 = vmatpush.msra.mxu0 %v153
    %214 = vmatpush.msra.mxu0 %v151
    %215 = vmatpush.msra.mxu0 %v149
    %216 = vmatpush.msra.mxu0 %v147
    %217 = vmatpush.msra.mxu0 %v145
    %218 = vmatpush.msra.mxu0 %v143
    %219 = vmatpush.msra.mxu0 %v141
    %220 = vmatpush.msra.mxu0 %v139
    %221 = vmatpush.msra.mxu0 %v137
    %222 = vmatpush.msra.mxu0 %v135
    %223 = vmatpush.msra.mxu0 %v133
    %224 = vmatpush.msra.mxu0 %v131
    %225 = vmatmul.f32.gmra.mxu0 %v122
    %v226 = vpop.f32.mrf.mxu0
    %v227 = vadd.f32 %v165, %v226
    %228 = vmatmul.f32.gmra.mxu0 %v123
    %v229 = vpop.f32.mrf.mxu0
    %v230 = vadd.f32 %v165, %v229
    %231 = vmatmul.f32.gmra.mxu0 %v124
    %v232 = vpop.f32.mrf.mxu0
    %v233 = vadd.f32 %v165, %v232
    %234 = vmatmul.f32.gmra.mxu0 %v125
    %v235 = vpop.f32.mrf.mxu0
    %v236 = vadd.f32 %v165, %v235
    %237 = vmatmul.f32.gmra.mxu0 %v126
    %v238 = vpop.f32.mrf.mxu0
    %v239 = vadd.f32 %v165, %v238
    %240 = vmatmul.f32.gmra.mxu0 %v127
    %v241 = vpop.f32.mrf.mxu0
    %v242 = vadd.f32 %v165, %v241
    %243 = vmatmul.f32.gmra.mxu0 %v128
    %v244 = vpop.f32.mrf.mxu0
    %v245 = vadd.f32 %v165, %v244
    %246 = vmatmul.f32.gmra.mxu0 %v129
    %v247 = vpop.f32.mrf.mxu0
    %v248 = vadd.f32 %v165, %v247
    %249 = vdwg.mxu0
    %v250 = vld [vmem:[#allocation8] sm:$0xff]
    %v251 = vld [vmem:[#allocation8 + $0x8] sm:$0xff]
    %v252 = vld [vmem:[#allocation8 + $0x10] sm:$0xff]
    %v253 = vld [vmem:[#allocation8 + $0x18] sm:$0xff]
    %v254 = vld [vmem:[#allocation8 + $0x20] sm:$0xff]
    %v255 = vld [vmem:[#allocation8 + $0x28] sm:$0xff]
    %v256 = vld [vmem:[#allocation8 + $0x30] sm:$0xff]
    %v257 = vld [vmem:[#allocation8 + $0x38] sm:$0xff]
    %v258 = vld [vmem:[#allocation8 + $0x40] sm:$0xff]
    %v259 = vld [vmem:[#allocation8 + $0x48] sm:$0xff]
    %v260 = vld [vmem:[#allocation8 + $0x50] sm:$0xff]
    %v261 = vld [vmem:[#allocation8 + $0x58] sm:$0xff]
    %v262 = vld [vmem:[#allocation8 + $0x60] sm:$0xff]
    %v263 = vld [vmem:[#allocation8 + $0x68] sm:$0xff]
    %v264 = vld [vmem:[#allocation8 + $0x70] sm:$0xff]
    %v265 = vld [vmem:[#allocation8 + $0x78] sm:$0xff]
    %v266 = vld [vmem:[#allocation8 + $0x80] sm:$0xff]
    %v267 = vld [vmem:[#allocation8 + $0x88] sm:$0xff]
    %v268 = vld [vmem:[#allocation8 + $0x90] sm:$0xff]
    %v269 = vld [vmem:[#allocation8 + $0x98] sm:$0xff]
    %v270 = vld [vmem:[#allocation8 + $0xa0] sm:$0xff]
    %v271 = vld [vmem:[#allocation8 + $0xa8] sm:$0xff]
    %v272 = vld [vmem:[#allocation8 + $0xb0] sm:$0xff]
    %v273 = vld [vmem:[#allocation8 + $0xb8] sm:$0xff]
    %v274 = vld [vmem:[#allocation8 + $0xc0] sm:$0xff]
    %v275 = vld [vmem:[#allocation8 + $0xc8] sm:$0xff]
    %v276 = vld [vmem:[#allocation8 + $0xd0] sm:$0xff]
    %v277 = vld [vmem:[#allocation8 + $0xd8] sm:$0xff]
    %v278 = vld [vmem:[#allocation8 + $0xe0] sm:$0xff]
    %v279 = vld [vmem:[#allocation8 + $0xe8] sm:$0xff]
    %v280 = vld [vmem:[#allocation8 + $0xf0] sm:$0xff]
    %v281 = vld [vmem:[#allocation8 + $0xf8] sm:$0xff]
    %v282 = vld [vmem:[#allocation8 + $0x100] sm:$0xff]
    %v283 = vld [vmem:[#allocation8 + $0x108] sm:$0xff]
    %v284 = vld [vmem:[#allocation8 + $0x110] sm:$0xff]
    %v285 = vld [vmem:[#allocation8 + $0x118] sm:$0xff]
    %v286 = vld [vmem:[#allocation8 + $0x120] sm:$0xff]
    %v287 = vld [vmem:[#allocation8 + $0x128] sm:$0xff]
    %v288 = vld [vmem:[#allocation8 + $0x130] sm:$0xff]
    %v289 = vld [vmem:[#allocation8 + $0x138] sm:$0xff]
    %v290 = vld [vmem:[#allocation8 + $0x140] sm:$0xff]
    %v291 = vld [vmem:[#allocation8 + $0x148] sm:$0xff]
    %v292 = vld [vmem:[#allocation8 + $0x150] sm:$0xff]
    %v293 = vld [vmem:[#allocation8 + $0x158] sm:$0xff]
    %v294 = vld [vmem:[#allocation8 + $0x160] sm:$0xff]
    %v295 = vld [vmem:[#allocation8 + $0x168] sm:$0xff]
    %v296 = vld [vmem:[#allocation8 + $0x170] sm:$0xff]
    %v297 = vld [vmem:[#allocation8 + $0x178] sm:$0xff]
    %v298 = vld [vmem:[#allocation8 + $0x180] sm:$0xff]
    %v299 = vld [vmem:[#allocation8 + $0x188] sm:$0xff]
    %v300 = vld [vmem:[#allocation8 + $0x190] sm:$0xff]
    %v301 = vld [vmem:[#allocation8 + $0x198] sm:$0xff]
    %v302 = vld [vmem:[#allocation8 + $0x1a0] sm:$0xff]
    %v303 = vld [vmem:[#allocation8 + $0x1a8] sm:$0xff]
    %v304 = vld [vmem:[#allocation8 + $0x1b0] sm:$0xff]
    %v305 = vld [vmem:[#allocation8 + $0x1b8] sm:$0xff]
    %v306 = vld [vmem:[#allocation8 + $0x1c0] sm:$0xff]
    %v307 = vld [vmem:[#allocation8 + $0x1c8] sm:$0xff]
    %v308 = vld [vmem:[#allocation8 + $0x1d0] sm:$0xff]
    %v309 = vld [vmem:[#allocation8 + $0x1d8] sm:$0xff]
    %v310 = vld [vmem:[#allocation8 + $0x1e0] sm:$0xff]
    %v311 = vld [vmem:[#allocation8 + $0x1e8] sm:$0xff]
    %v312 = vld [vmem:[#allocation8 + $0x1f0] sm:$0xff]
    %v313 = vld [vmem:[#allocation8 + $0x1f8] sm:$0xff]
    %v314 = vtanh.pop %v186
    %v315 = vtanh.pop %v227
    %v316 = vld [vmem:[#allocation10] sm:$0xff]
    %v317 = vld [vmem:[#allocation10 + $0x8] sm:$0xff]
    %v318 = vld [vmem:[#allocation10 + $0x10] sm:$0xff]
    %v319 = vld [vmem:[#allocation10 + $0x18] sm:$0xff]
    %v320 = vld [vmem:[#allocation10 + $0x20] sm:$0xff]
    %v321 = vld [vmem:[#allocation10 + $0x28] sm:$0xff]
    %v322 = vld [vmem:[#allocation10 + $0x30] sm:$0xff]
    %v323 = vld [vmem:[#allocation10 + $0x38] sm:$0xff]
    %v324 = vld [vmem:[#allocation10 + $0x40] sm:$0xff]
    %v325 = vld [vmem:[#allocation10 + $0x48] sm:$0xff]
    %v326 = vld [vmem:[#allocation10 + $0x50] sm:$0xff]
    %v327 = vld [vmem:[#allocation10 + $0x58] sm:$0xff]
    %v328 = vld [vmem:[#allocation10 + $0x60] sm:$0xff]
    %v329 = vld [vmem:[#allocation10 + $0x68] sm:$0xff]
    %v330 = vld [vmem:[#allocation10 + $0x70] sm:$0xff]
    %v331 = vld [vmem:[#allocation10 + $0x78] sm:$0xff]
    %v332 = vld [vmem:[#allocation10 + $0x80] sm:$0xff]
    %v333 = vld [vmem:[#allocation10 + $0x88] sm:$0xff]
    %v334 = vld [vmem:[#allocation10 + $0x90] sm:$0xff]
    %v335 = vld [vmem:[#allocation10 + $0x98] sm:$0xff]
    %v336 = vld [vmem:[#allocation10 + $0xa0] sm:$0xff]
    %v337 = vld [vmem:[#allocation10 + $0xa8] sm:$0xff]
    %v338 = vld [vmem:[#allocation10 + $0xb0] sm:$0xff]
    %v339 = vld [vmem:[#allocation10 + $0xb8] sm:$0xff]
    %v340 = vld [vmem:[#allocation10 + $0xc0] sm:$0xff]
    %v341 = vld [vmem:[#allocation10 + $0xc8] sm:$0xff]
    %v342 = vld [vmem:[#allocation10 + $0xd0] sm:$0xff]
    %v343 = vld [vmem:[#allocation10 + $0xd8] sm:$0xff]
    %v344 = vld [vmem:[#allocation10 + $0xe0] sm:$0xff]
    %v345 = vld [vmem:[#allocation10 + $0xe8] sm:$0xff]
    %v346 = vld [vmem:[#allocation10 + $0xf0] sm:$0xff]
    %v347 = vld [vmem:[#allocation10 + $0xf8] sm:$0xff]
    %348 = vmatpush.msra.mxu0 %v280
    %349 = vmatpush.msra.mxu0 %v278
    %350 = vmatpush.msra.mxu0 %v276
    %351 = vmatpush.msra.mxu0 %v274
    %352 = vmatpush.msra.mxu0 %v272
    %353 = vmatpush.msra.mxu0 %v270
    %354 = vmatpush.msra.mxu0 %v268
    %355 = vmatpush.msra.mxu0 %v266
    %356 = vmatpush.msra.mxu0 %v264
    %357 = vmatpush.msra.mxu0 %v262
    %358 = vmatpush.msra.mxu0 %v260
    %359 = vmatpush.msra.mxu0 %v258
    %360 = vmatpush.msra.mxu0 %v256
    %361 = vmatpush.msra.mxu0 %v254
    %362 = vmatpush.msra.mxu0 %v252
    %363 = vmatpush.msra.mxu0 %v250
    %364 = vmatmul.f32.gmra.mxu0 %v314
    %v365 = vpop.f32.mrf.mxu0
    %v366 = vadd.f32 0.0, %v365
    %367 = vdwg.mxu0
    %368 = vmatpush.msra.mxu0 %v312
    %369 = vmatpush.msra.mxu0 %v310
    %370 = vmatpush.msra.mxu0 %v308
    %371 = vmatpush.msra.mxu0 %v306
    %372 = vmatpush.msra.mxu0 %v304
    %373 = vmatpush.msra.mxu0 %v302
    %374 = vmatpush.msra.mxu0 %v300
    %375 = vmatpush.msra.mxu0 %v298
    %376 = vmatpush.msra.mxu0 %v296
    %377 = vmatpush.msra.mxu0 %v294
    %378 = vmatpush.msra.mxu0 %v292
    %379 = vmatpush.msra.mxu0 %v290
    %380 = vmatpush.msra.mxu0 %v288
    %381 = vmatpush.msra.mxu0 %v286
    %382 = vmatpush.msra.mxu0 %v284
    %383 = vmatpush.msra.mxu0 %v282
    %384 = vmatmul.f32.gmra.mxu0 %v315
    %v385 = vpop.f32.mrf.mxu0
    %v386 = vadd.f32 %v366, %v385
    %387 = vdwg.mxu0
    %388 = vmatpush.msra.mxu0 %v281
    %389 = vmatpush.msra.mxu0 %v279
    %390 = vmatpush.msra.mxu0 %v277
    %391 = vmatpush.msra.mxu0 %v275
    %392 = vmatpush.msra.mxu0 %v273
    %393 = vmatpush.msra.mxu0 %v271
    %394 = vmatpush.msra.mxu0 %v269
    %395 = vmatpush.msra.mxu0 %v267
    %396 = vmatpush.msra.mxu0 %v265
    %397 = vmatpush.msra.mxu0 %v263
    %398 = vmatpush.msra.mxu0 %v261
    %399 = vmatpush.msra.mxu0 %v259
    %400 = vmatpush.msra.mxu0 %v257
    %401 = vmatpush.msra.mxu0 %v255
    %402 = vmatpush.msra.mxu0 %v253
    %403 = vmatpush.msra.mxu0 %v251
    %404 = vmatmul.f32.gmra.mxu0 %v314
    %v405 = vpop.f32.mrf.mxu0
    %v406 = vadd.f32 0.0, %v405
    %407 = vdwg.mxu0
    %408 = vmatpush.msra.mxu0 %v313
    %409 = vmatpush.msra.mxu0 %v311
    %410 = vmatpush.msra.mxu0 %v309
    %411 = vmatpush.msra.mxu0 %v307
    %412 = vmatpush.msra.mxu0 %v305
    %413 = vmatpush.msra.mxu0 %v303
    %414 = vmatpush.msra.mxu0 %v301
    %415 = vmatpush.msra.mxu0 %v299
    %416 = vmatpush.msra.mxu0 %v297
    %417 = vmatpush.msra.mxu0 %v295
    %418 = vmatpush.msra.mxu0 %v293
    %419 = vmatpush.msra.mxu0 %v291
    %420 = vmatpush.msra.mxu0 %v289
    %421 = vmatpush.msra.mxu0 %v287
    %422 = vmatpush.msra.mxu0 %v285
    %423 = vmatpush.msra.mxu0 %v283
    %424 = vmatmul.f32.gmra.mxu0 %v315
    %v425 = vpop.f32.mrf.mxu0
    %v426 = vadd.f32 %v406, %v425
    %427 = vdwg.mxu0
    %v428 = vadd.f32 %v189, %v386
    %v429 = vadd.f32 %v230, %v426
    %v430 = vtanh.pop %v428
    %v431 = vtanh.pop %v429
    %s432 = scalar_lea.vmem [#allocation10], 256
    %v433 = vld [vmem:[%s432] sm:$0xff]
    %v434 = vld [vmem:[%s432 + $0x8] sm:$0xff]
    %v435 = vld [vmem:[%s432 + $0x10] sm:$0xff]
    %v436 = vld [vmem:[%s432 + $0x18] sm:$0xff]
    %v437 = vld [vmem:[%s432 + $0x20] sm:$0xff]
    %v438 = vld [vmem:[%s432 + $0x28] sm:$0xff]
    %v439 = vld [vmem:[%s432 + $0x30] sm:$0xff]
    %v440 = vld [vmem:[%s432 + $0x38] sm:$0xff]
    %v441 = vld [vmem:[%s432 + $0x40] sm:$0xff]
    %v442 = vld [vmem:[%s432 + $0x48] sm:$0xff]
    %v443 = vld [vmem:[%s432 + $0x50] sm:$0xff]
    %v444 = vld [vmem:[%s432 + $0x58] sm:$0xff]
    %v445 = vld [vmem:[%s432 + $0x60] sm:$0xff]
    %v446 = vld [vmem:[%s432 + $0x68] sm:$0xff]
    %v447 = vld [vmem:[%s432 + $0x70] sm:$0xff]
    %v448 = vld [vmem:[%s432 + $0x78] sm:$0xff]
    %v449 = vld [vmem:[%s432 + $0x80] sm:$0xff]
    %v450 = vld [vmem:[%s432 + $0x88] sm:$0xff]
    %v451 = vld [vmem:[%s432 + $0x90] sm:$0xff]
    %v452 = vld [vmem:[%s432 + $0x98] sm:$0xff]
    %v453 = vld [vmem:[%s432 + $0xa0] sm:$0xff]
    %v454 = vld [vmem:[%s432 + $0xa8] sm:$0xff]
    %v455 = vld [vmem:[%s432 + $0xb0] sm:$0xff]
    %v456 = vld [vmem:[%s432 + $0xb8] sm:$0xff]
    %v457 = vld [vmem:[%s432 + $0xc0] sm:$0xff]
    %v458 = vld [vmem:[%s432 + $0xc8] sm:$0xff]
    %v459 = vld [vmem:[%s432 + $0xd0] sm:$0xff]
    %v460 = vld [vmem:[%s432 + $0xd8] sm:$0xff]
    %v461 = vld [vmem:[%s432 + $0xe0] sm:$0xff]
    %v462 = vld [vmem:[%s432 + $0xe8] sm:$0xff]
    %v463 = vld [vmem:[%s432 + $0xf0] sm:$0xff]
    %v464 = vld [vmem:[%s432 + $0xf8] sm:$0xff]
    %465 = vmatpush.msra.mxu0 %v448
    %466 = vmatpush.msra.mxu0 %v447
    %467 = vmatpush.msra.mxu0 %v446
    %468 = vmatpush.msra.mxu0 %v445
    %469 = vmatpush.msra.mxu0 %v444
    %470 = vmatpush.msra.mxu0 %v443
    %471 = vmatpush.msra.mxu0 %v442
    %472 = vmatpush.msra.mxu0 %v441
    %473 = vmatpush.msra.mxu0 %v440
    %474 = vmatpush.msra.mxu0 %v439
    %475 = vmatpush.msra.mxu0 %v438
    %476 = vmatpush.msra.mxu0 %v437
    %477 = vmatpush.msra.mxu0 %v436
    %478 = vmatpush.msra.mxu0 %v435
    %479 = vmatpush.msra.mxu0 %v434
    %480 = vmatpush.msra.mxu0 %v433
    %481 = vmatmul.f32.gmra.mxu0 %v430
    %v482 = vpop.f32.mrf.mxu0
    %v483 = vadd.f32 0.0, %v482
    %484 = vdwg.mxu0
    %485 = vmatpush.msra.mxu0 %v464
    %486 = vmatpush.msra.mxu0 %v463
    %487 = vmatpush.msra.mxu0 %v462
    %488 = vmatpush.msra.mxu0 %v461
    %489 = vmatpush.msra.mxu0 %v460
    %490 = vmatpush.msra.mxu0 %v459
    %491 = vmatpush.msra.mxu0 %v458
    %492 = vmatpush.msra.mxu0 %v457
    %493 = vmatpush.msra.mxu0 %v456
    %494 = vmatpush.msra.mxu0 %v455
    %495 = vmatpush.msra.mxu0 %v454
    %496 = vmatpush.msra.mxu0 %v453
    %497 = vmatpush.msra.mxu0 %v452
    %498 = vmatpush.msra.mxu0 %v451
    %499 = vmatpush.msra.mxu0 %v450
    %500 = vmatpush.msra.mxu0 %v449
    %501 = vmatmul.f32.gmra.mxu0 %v431
    %v502 = vpop.f32.mrf.mxu0
    %v503 = vadd.f32 %v483, %v502
    %504 = vdwg.mxu0
    %505 = vmatpush.msra.mxu0 %v331
    %506 = vmatpush.msra.mxu0 %v330
    %507 = vmatpush.msra.mxu0 %v329
    %508 = vmatpush.msra.mxu0 %v328
    %509 = vmatpush.msra.mxu0 %v327
    %510 = vmatpush.msra.mxu0 %v326
    %511 = vmatpush.msra.mxu0 %v325
    %512 = vmatpush.msra.mxu0 %v324
    %513 = vmatpush.msra.mxu0 %v323
    %514 = vmatpush.msra.mxu0 %v322
    %515 = vmatpush.msra.mxu0 %v321
    %516 = vmatpush.msra.mxu0 %v320
    %517 = vmatpush.msra.mxu0 %v319
    %518 = vmatpush.msra.mxu0 %v318
    %519 = vmatpush.msra.mxu0 %v317
    %520 = vmatpush.msra.mxu0 %v316
    %521 = vmatmul.f32.gmra.mxu0 %v314
    %v522 = vpop.f32.mrf.mxu0
    %v523 = vadd.f32 %v503, %v522
    %524 = vdwg.mxu0
    %525 = vmatpush.msra.mxu0 %v347
    %526 = vmatpush.msra.mxu0 %v346
    %527 = vmatpush.msra.mxu0 %v345
    %528 = vmatpush.msra.mxu0 %v344
    %529 = vmatpush.msra.mxu0 %v343
    %530 = vmatpush.msra.mxu0 %v342
    %531 = vmatpush.msra.mxu0 %v341
    %532 = vmatpush.msra.mxu0 %v340
    %533 = vmatpush.msra.mxu0 %v339
    %534 = vmatpush.msra.mxu0 %v338
    %535 = vmatpush.msra.mxu0 %v337
    %536 = vmatpush.msra.mxu0 %v336
    %537 = vmatpush.msra.mxu0 %v335
    %538 = vmatpush.msra.mxu0 %v334
    %539 = vmatpush.msra.mxu0 %v333
    %540 = vmatpush.msra.mxu0 %v332
    %541 = vmatmul.f32.gmra.mxu0 %v315
    %v542 = vpop.f32.mrf.mxu0
    %v543 = vadd.f32 %v523, %v542
    %544 = vdwg.mxu0
    %545 = vmatpush.msra.mxu0 %v280
    %546 = vmatpush.msra.mxu0 %v278
    %547 = vmatpush.msra.mxu0 %v276
    %548 = vmatpush.msra.mxu0 %v274
    %549 = vmatpush.msra.mxu0 %v272
    %550 = vmatpush.msra.mxu0 %v270
    %551 = vmatpush.msra.mxu0 %v268
    %552 = vmatpush.msra.mxu0 %v266
    %553 = vmatpush.msra.mxu0 %v264
    %554 = vmatpush.msra.mxu0 %v262
    %555 = vmatpush.msra.mxu0 %v260
    %556 = vmatpush.msra.mxu0 %v258
    %557 = vmatpush.msra.mxu0 %v256
    %558 = vmatpush.msra.mxu0 %v254
    %559 = vmatpush.msra.mxu0 %v252
    %560 = vmatpush.msra.mxu0 %v250
    %561 = vmatmul.f32.gmra.mxu0 %v430
    %v562 = vpop.f32.mrf.mxu0
    %v563 = vadd.f32 0.0, %v562
    %564 = vdwg.mxu0
    %565 = vmatpush.msra.mxu0 %v312
    %566 = vmatpush.msra.mxu0 %v310
    %567 = vmatpush.msra.mxu0 %v308
    %568 = vmatpush.msra.mxu0 %v306
    %569 = vmatpush.msra.mxu0 %v304
    %570 = vmatpush.msra.mxu0 %v302
    %571 = vmatpush.msra.mxu0 %v300
    %572 = vmatpush.msra.mxu0 %v298
    %573 = vmatpush.msra.mxu0 %v296
    %574 = vmatpush.msra.mxu0 %v294
    %575 = vmatpush.msra.mxu0 %v292
    %576 = vmatpush.msra.mxu0 %v290
    %577 = vmatpush.msra.mxu0 %v288
    %578 = vmatpush.msra.mxu0 %v286
    %579 = vmatpush.msra.mxu0 %v284
    %580 = vmatpush.msra.mxu0 %v282
    %581 = vmatmul.f32.gmra.mxu0 %v431
    %v582 = vpop.f32.mrf.mxu0
    %v583 = vadd.f32 %v563, %v582
    %584 = vdwg.mxu0
    %585 = vmatpush.msra.mxu0 %v281
    %586 = vmatpush.msra.mxu0 %v279
    %587 = vmatpush.msra.mxu0 %v277
    %588 = vmatpush.msra.mxu0 %v275
    %589 = vmatpush.msra.mxu0 %v273
    %590 = vmatpush.msra.mxu0 %v271
    %591 = vmatpush.msra.mxu0 %v269
    %592 = vmatpush.msra.mxu0 %v267
    %593 = vmatpush.msra.mxu0 %v265
    %594 = vmatpush.msra.mxu0 %v263
    %595 = vmatpush.msra.mxu0 %v261
    %596 = vmatpush.msra.mxu0 %v259
    %597 = vmatpush.msra.mxu0 %v257
    %598 = vmatpush.msra.mxu0 %v255
    %599 = vmatpush.msra.mxu0 %v253
    %600 = vmatpush.msra.mxu0 %v251
    %601 = vmatmul.f32.gmra.mxu0 %v430
    %v602 = vpop.f32.mrf.mxu0
    %v603 = vadd.f32 0.0, %v602
    %604 = vdwg.mxu0
    %605 = vmatpush.msra.mxu0 %v313
    %606 = vmatpush.msra.mxu0 %v311
    %607 = vmatpush.msra.mxu0 %v309
    %608 = vmatpush.msra.mxu0 %v307
    %609 = vmatpush.msra.mxu0 %v305
    %610 = vmatpush.msra.mxu0 %v303
    %611 = vmatpush.msra.mxu0 %v301
    %612 = vmatpush.msra.mxu0 %v299
    %613 = vmatpush.msra.mxu0 %v297
    %614 = vmatpush.msra.mxu0 %v295
    %615 = vmatpush.msra.mxu0 %v293
    %616 = vmatpush.msra.mxu0 %v291
    %617 = vmatpush.msra.mxu0 %v289
    %618 = vmatpush.msra.mxu0 %v287
    %619 = vmatpush.msra.mxu0 %v285
    %620 = vmatpush.msra.mxu0 %v283
    %621 = vmatmul.f32.gmra.mxu0 %v431
    %v622 = vpop.f32.mrf.mxu0
    %v623 = vadd.f32 %v603, %v622
    %624 = vdwg.mxu0
    %v625 = vadd.f32 %v192, %v583
    %v626 = vadd.f32 %v233, %v623
    %v627 = vtanh.pop %v625
    %v628 = vtanh.pop %v626
    %s629 = scalar_lea.vmem [#allocation10], 512
    %v630 = vld [vmem:[%s629] sm:$0xff]
    %v631 = vld [vmem:[%s629 + $0x8] sm:$0xff]
    %v632 = vld [vmem:[%s629 + $0x10] sm:$0xff]
    %v633 = vld [vmem:[%s629 + $0x18] sm:$0xff]
    %v634 = vld [vmem:[%s629 + $0x20] sm:$0xff]
    %v635 = vld [vmem:[%s629 + $0x28] sm:$0xff]
    %v636 = vld [vmem:[%s629 + $0x30] sm:$0xff]
    %v637 = vld [vmem:[%s629 + $0x38] sm:$0xff]
    %v638 = vld [vmem:[%s629 + $0x40] sm:$0xff]
    %v639 = vld [vmem:[%s629 + $0x48] sm:$0xff]
    %v640 = vld [vmem:[%s629 + $0x50] sm:$0xff]
    %v641 = vld [vmem:[%s629 + $0x58] sm:$0xff]
    %v642 = vld [vmem:[%s629 + $0x60] sm:$0xff]
    %v643 = vld [vmem:[%s629 + $0x68] sm:$0xff]
    %v644 = vld [vmem:[%s629 + $0x70] sm:$0xff]
    %v645 = vld [vmem:[%s629 + $0x78] sm:$0xff]
    %v646 = vld [vmem:[%s629 + $0x80] sm:$0xff]
    %v647 = vld [vmem:[%s629 + $0x88] sm:$0xff]
    %v648 = vld [vmem:[%s629 + $0x90] sm:$0xff]
    %v649 = vld [vmem:[%s629 + $0x98] sm:$0xff]
    %v650 = vld [vmem:[%s629 + $0xa0] sm:$0xff]
    %v651 = vld [vmem:[%s629 + $0xa8] sm:$0xff]
    %v652 = vld [vmem:[%s629 + $0xb0] sm:$0xff]
    %v653 = vld [vmem:[%s629 + $0xb8] sm:$0xff]
    %v654 = vld [vmem:[%s629 + $0xc0] sm:$0xff]
    %v655 = vld [vmem:[%s629 + $0xc8] sm:$0xff]
    %v656 = vld [vmem:[%s629 + $0xd0] sm:$0xff]
    %v657 = vld [vmem:[%s629 + $0xd8] sm:$0xff]
    %v658 = vld [vmem:[%s629 + $0xe0] sm:$0xff]
    %v659 = vld [vmem:[%s629 + $0xe8] sm:$0xff]
    %v660 = vld [vmem:[%s629 + $0xf0] sm:$0xff]
    %v661 = vld [vmem:[%s629 + $0xf8] sm:$0xff]
    %662 = vmatpush.msra.mxu0 %v645
    %663 = vmatpush.msra.mxu0 %v644
    %664 = vmatpush.msra.mxu0 %v643
    %665 = vmatpush.msra.mxu0 %v642
    %666 = vmatpush.msra.mxu0 %v641
    %667 = vmatpush.msra.mxu0 %v640
    %668 = vmatpush.msra.mxu0 %v639
    %669 = vmatpush.msra.mxu0 %v638
    %670 = vmatpush.msra.mxu0 %v637
    %671 = vmatpush.msra.mxu0 %v636
    %672 = vmatpush.msra.mxu0 %v635
    %673 = vmatpush.msra.mxu0 %v634
    %674 = vmatpush.msra.mxu0 %v633
    %675 = vmatpush.msra.mxu0 %v632
    %676 = vmatpush.msra.mxu0 %v631
    %677 = vmatpush.msra.mxu0 %v630
    %678 = vmatmul.f32.gmra.mxu0 %v627
    %v679 = vpop.f32.mrf.mxu0
    %v680 = vadd.f32 0.0, %v679
    %681 = vdwg.mxu0
    %682 = vmatpush.msra.mxu0 %v661
    %683 = vmatpush.msra.mxu0 %v660
    %684 = vmatpush.msra.mxu0 %v659
    %685 = vmatpush.msra.mxu0 %v658
    %686 = vmatpush.msra.mxu0 %v657
    %687 = vmatpush.msra.mxu0 %v656
    %688 = vmatpush.msra.mxu0 %v655
    %689 = vmatpush.msra.mxu0 %v654
    %690 = vmatpush.msra.mxu0 %v653
    %691 = vmatpush.msra.mxu0 %v652
    %692 = vmatpush.msra.mxu0 %v651
    %693 = vmatpush.msra.mxu0 %v650
    %694 = vmatpush.msra.mxu0 %v649
    %695 = vmatpush.msra.mxu0 %v648
    %696 = vmatpush.msra.mxu0 %v647
    %697 = vmatpush.msra.mxu0 %v646
    %698 = vmatmul.f32.gmra.mxu0 %v628
    %v699 = vpop.f32.mrf.mxu0
    %v700 = vadd.f32 %v680, %v699
    %701 = vdwg.mxu0
    %v702 = vadd.f32 %v543, %v700
    %703 = vmatpush.msra.mxu0 %v280
    %704 = vmatpush.msra.mxu0 %v278
    %705 = vmatpush.msra.mxu0 %v276
    %706 = vmatpush.msra.mxu0 %v274
    %707 = vmatpush.msra.mxu0 %v272
    %708 = vmatpush.msra.mxu0 %v270
    %709 = vmatpush.msra.mxu0 %v268
    %710 = vmatpush.msra.mxu0 %v266
    %711 = vmatpush.msra.mxu0 %v264
    %712 = vmatpush.msra.mxu0 %v262
    %713 = vmatpush.msra.mxu0 %v260
    %714 = vmatpush.msra.mxu0 %v258
    %715 = vmatpush.msra.mxu0 %v256
    %716 = vmatpush.msra.mxu0 %v254
    %717 = vmatpush.msra.mxu0 %v252
    %718 = vmatpush.msra.mxu0 %v250
    %719 = vmatmul.f32.gmra.mxu0 %v627
    %v720 = vpop.f32.mrf.mxu0
    %v721 = vadd.f32 0.0, %v720
    %722 = vdwg.mxu0
    %723 = vmatpush.msra.mxu0 %v312
    %724 = vmatpush.msra.mxu0 %v310
    %725 = vmatpush.msra.mxu0 %v308
    %726 = vmatpush.msra.mxu0 %v306
    %727 = vmatpush.msra.mxu0 %v304
    %728 = vmatpush.msra.mxu0 %v302
    %729 = vmatpush.msra.mxu0 %v300
    %730 = vmatpush.msra.mxu0 %v298
    %731 = vmatpush.msra.mxu0 %v296
    %732 = vmatpush.msra.mxu0 %v294
    %733 = vmatpush.msra.mxu0 %v292
    %734 = vmatpush.msra.mxu0 %v290
    %735 = vmatpush.msra.mxu0 %v288
    %736 = vmatpush.msra.mxu0 %v286
    %737 = vmatpush.msra.mxu0 %v284
    %738 = vmatpush.msra.mxu0 %v282
    %739 = vmatmul.f32.gmra.mxu0 %v628
    %v740 = vpop.f32.mrf.mxu0
    %v741 = vadd.f32 %v721, %v740
    %742 = vdwg.mxu0
    %743 = vmatpush.msra.mxu0 %v281
    %744 = vmatpush.msra.mxu0 %v279
    %745 = vmatpush.msra.mxu0 %v277
    %746 = vmatpush.msra.mxu0 %v275
    %747 = vmatpush.msra.mxu0 %v273
    %748 = vmatpush.msra.mxu0 %v271
    %749 = vmatpush.msra.mxu0 %v269
    %750 = vmatpush.msra.mxu0 %v267
    %751 = vmatpush.msra.mxu0 %v265
    %752 = vmatpush.msra.mxu0 %v263
    %753 = vmatpush.msra.mxu0 %v261
    %754 = vmatpush.msra.mxu0 %v259
    %755 = vmatpush.msra.mxu0 %v257
    %756 = vmatpush.msra.mxu0 %v255
    %757 = vmatpush.msra.mxu0 %v253
    %758 = vmatpush.msra.mxu0 %v251
    %759 = vmatmul.f32.gmra.mxu0 %v627
    %v760 = vpop.f32.mrf.mxu0
    %v761 = vadd.f32 0.0, %v760
    %762 = vdwg.mxu0
    %763 = vmatpush.msra.mxu0 %v313
    %764 = vmatpush.msra.mxu0 %v311
    %765 = vmatpush.msra.mxu0 %v309
    %766 = vmatpush.msra.mxu0 %v307
    %767 = vmatpush.msra.mxu0 %v305
    %768 = vmatpush.msra.mxu0 %v303
    %769 = vmatpush.msra.mxu0 %v301
    %770 = vmatpush.msra.mxu0 %v299
    %771 = vmatpush.msra.mxu0 %v297
    %772 = vmatpush.msra.mxu0 %v295
    %773 = vmatpush.msra.mxu0 %v293
    %774 = vmatpush.msra.mxu0 %v291
    %775 = vmatpush.msra.mxu0 %v289
    %776 = vmatpush.msra.mxu0 %v287
    %777 = vmatpush.msra.mxu0 %v285
    %778 = vmatpush.msra.mxu0 %v283
    %779 = vmatmul.f32.gmra.mxu0 %v628
    %v780 = vpop.f32.mrf.mxu0
    %v781 = vadd.f32 %v761, %v780
    %782 = vdwg.mxu0
    %v783 = vadd.f32 %v195, %v741
    %v784 = vadd.f32 %v236, %v781
    %v785 = vtanh.pop %v783
    %v786 = vtanh.pop %v784
    %s787 = scalar_lea.vmem [#allocation10], 768
    %v788 = vld [vmem:[%s787] sm:$0xff]
    %v789 = vld [vmem:[%s787 + $0x8] sm:$0xff]
    %v790 = vld [vmem:[%s787 + $0x10] sm:$0xff]
    %v791 = vld [vmem:[%s787 + $0x18] sm:$0xff]
    %v792 = vld [vmem:[%s787 + $0x20] sm:$0xff]
    %v793 = vld [vmem:[%s787 + $0x28] sm:$0xff]
    %v794 = vld [vmem:[%s787 + $0x30] sm:$0xff]
    %v795 = vld [vmem:[%s787 + $0x38] sm:$0xff]
    %v796 = vld [vmem:[%s787 + $0x40] sm:$0xff]
    %v797 = vld [vmem:[%s787 + $0x48] sm:$0xff]
    %v798 = vld [vmem:[%s787 + $0x50] sm:$0xff]
    %v799 = vld [vmem:[%s787 + $0x58] sm:$0xff]
    %v800 = vld [vmem:[%s787 + $0x60] sm:$0xff]
    %v801 = vld [vmem:[%s787 + $0x68] sm:$0xff]
    %v802 = vld [vmem:[%s787 + $0x70] sm:$0xff]
    %v803 = vld [vmem:[%s787 + $0x78] sm:$0xff]
    %v804 = vld [vmem:[%s787 + $0x80] sm:$0xff]
    %v805 = vld [vmem:[%s787 + $0x88] sm:$0xff]
    %v806 = vld [vmem:[%s787 + $0x90] sm:$0xff]
    %v807 = vld [vmem:[%s787 + $0x98] sm:$0xff]
    %v808 = vld [vmem:[%s787 + $0xa0] sm:$0xff]
    %v809 = vld [vmem:[%s787 + $0xa8] sm:$0xff]
    %v810 = vld [vmem:[%s787 + $0xb0] sm:$0xff]
    %v811 = vld [vmem:[%s787 + $0xb8] sm:$0xff]
    %v812 = vld [vmem:[%s787 + $0xc0] sm:$0xff]
    %v813 = vld [vmem:[%s787 + $0xc8] sm:$0xff]
    %v814 = vld [vmem:[%s787 + $0xd0] sm:$0xff]
    %v815 = vld [vmem:[%s787 + $0xd8] sm:$0xff]
    %v816 = vld [vmem:[%s787 + $0xe0] sm:$0xff]
    %v817 = vld [vmem:[%s787 + $0xe8] sm:$0xff]
    %v818 = vld [vmem:[%s787 + $0xf0] sm:$0xff]
    %v819 = vld [vmem:[%s787 + $0xf8] sm:$0xff]
    %820 = vmatpush.msra.mxu0 %v803
    %821 = vmatpush.msra.mxu0 %v802
    %822 = vmatpush.msra.mxu0 %v801
    %823 = vmatpush.msra.mxu0 %v800
    %824 = vmatpush.msra.mxu0 %v799
    %825 = vmatpush.msra.mxu0 %v798
    %826 = vmatpush.msra.mxu0 %v797
    %827 = vmatpush.msra.mxu0 %v796
    %828 = vmatpush.msra.mxu0 %v795
    %829 = vmatpush.msra.mxu0 %v794
    %830 = vmatpush.msra.mxu0 %v793
    %831 = vmatpush.msra.mxu0 %v792
    %832 = vmatpush.msra.mxu0 %v791
    %833 = vmatpush.msra.mxu0 %v790
    %834 = vmatpush.msra.mxu0 %v789
    %835 = vmatpush.msra.mxu0 %v788
    %836 = vmatmul.f32.gmra.mxu0 %v785
    %v837 = vpop.f32.mrf.mxu0
    %v838 = vadd.f32 0.0, %v837
    %839 = vdwg.mxu0
    %840 = vmatpush.msra.mxu0 %v819
    %841 = vmatpush.msra.mxu0 %v818
    %842 = vmatpush.msra.mxu0 %v817
    %843 = vmatpush.msra.mxu0 %v816
    %844 = vmatpush.msra.mxu0 %v815
    %845 = vmatpush.msra.mxu0 %v814
    %846 = vmatpush.msra.mxu0 %v813
    %847 = vmatpush.msra.mxu0 %v812
    %848 = vmatpush.msra.mxu0 %v811
    %849 = vmatpush.msra.mxu0 %v810
    %850 = vmatpush.msra.mxu0 %v809
    %851 = vmatpush.msra.mxu0 %v808
    %852 = vmatpush.msra.mxu0 %v807
    %853 = vmatpush.msra.mxu0 %v806
    %854 = vmatpush.msra.mxu0 %v805
    %855 = vmatpush.msra.mxu0 %v804
    %856 = vmatmul.f32.gmra.mxu0 %v786
    %v857 = vpop.f32.mrf.mxu0
    %v858 = vadd.f32 %v838, %v857
    %859 = vdwg.mxu0
    %v860 = vadd.f32 %v702, %v858
    %861 = vmatpush.msra.mxu0 %v280
    %862 = vmatpush.msra.mxu0 %v278
    %863 = vmatpush.msra.mxu0 %v276
    %864 = vmatpush.msra.mxu0 %v274
    %865 = vmatpush.msra.mxu0 %v272
    %866 = vmatpush.msra.mxu0 %v270
    %867 = vmatpush.msra.mxu0 %v268
    %868 = vmatpush.msra.mxu0 %v266
    %869 = vmatpush.msra.mxu0 %v264
    %870 = vmatpush.msra.mxu0 %v262
    %871 = vmatpush.msra.mxu0 %v260
    %872 = vmatpush.msra.mxu0 %v258
    %873 = vmatpush.msra.mxu0 %v256
    %874 = vmatpush.msra.mxu0 %v254
    %875 = vmatpush.msra.mxu0 %v252
    %876 = vmatpush.msra.mxu0 %v250
    %877 = vmatmul.f32.gmra.mxu0 %v785
    %v878 = vpop.f32.mrf.mxu0
    %v879 = vadd.f32 0.0, %v878
    %880 = vdwg.mxu0
    %881 = vmatpush.msra.mxu0 %v312
    %882 = vmatpush.msra.mxu0 %v310
    %883 = vmatpush.msra.mxu0 %v308
    %884 = vmatpush.msra.mxu0 %v306
    %885 = vmatpush.msra.mxu0 %v304
    %886 = vmatpush.msra.mxu0 %v302
    %887 = vmatpush.msra.mxu0 %v300
    %888 = vmatpush.msra.mxu0 %v298
    %889 = vmatpush.msra.mxu0 %v296
    %890 = vmatpush.msra.mxu0 %v294
    %891 = vmatpush.msra.mxu0 %v292
    %892 = vmatpush.msra.mxu0 %v290
    %893 = vmatpush.msra.mxu0 %v288
    %894 = vmatpush.msra.mxu0 %v286
    %895 = vmatpush.msra.mxu0 %v284
    %896 = vmatpush.msra.mxu0 %v282
    %897 = vmatmul.f32.gmra.mxu0 %v786
    %v898 = vpop.f32.mrf.mxu0
    %v899 = vadd.f32 %v879, %v898
    %900 = vdwg.mxu0
    %901 = vmatpush.msra.mxu0 %v281
    %902 = vmatpush.msra.mxu0 %v279
    %903 = vmatpush.msra.mxu0 %v277
    %904 = vmatpush.msra.mxu0 %v275
    %905 = vmatpush.msra.mxu0 %v273
    %906 = vmatpush.msra.mxu0 %v271
    %907 = vmatpush.msra.mxu0 %v269
    %908 = vmatpush.msra.mxu0 %v267
    %909 = vmatpush.msra.mxu0 %v265
    %910 = vmatpush.msra.mxu0 %v263
    %911 = vmatpush.msra.mxu0 %v261
    %912 = vmatpush.msra.mxu0 %v259
    %913 = vmatpush.msra.mxu0 %v257
    %914 = vmatpush.msra.mxu0 %v255
    %915 = vmatpush.msra.mxu0 %v253
    %916 = vmatpush.msra.mxu0 %v251
    %917 = vmatmul.f32.gmra.mxu0 %v785
    %v918 = vpop.f32.mrf.mxu0
    %v919 = vadd.f32 0.0, %v918
    %920 = vdwg.mxu0
    %921 = vmatpush.msra.mxu0 %v313
    %922 = vmatpush.msra.mxu0 %v311
    %923 = vmatpush.msra.mxu0 %v309
    %924 = vmatpush.msra.mxu0 %v307
    %925 = vmatpush.msra.mxu0 %v305
    %926 = vmatpush.msra.mxu0 %v303
    %927 = vmatpush.msra.mxu0 %v301
    %928 = vmatpush.msra.mxu0 %v299
    %929 = vmatpush.msra.mxu0 %v297
    %930 = vmatpush.msra.mxu0 %v295
    %931 = vmatpush.msra.mxu0 %v293
    %932 = vmatpush.msra.mxu0 %v291
    %933 = vmatpush.msra.mxu0 %v289
    %934 = vmatpush.msra.mxu0 %v287
    %935 = vmatpush.msra.mxu0 %v285
    %936 = vmatpush.msra.mxu0 %v283
    %937 = vmatmul.f32.gmra.mxu0 %v786
    %v938 = vpop.f32.mrf.mxu0
    %v939 = vadd.f32 %v919, %v938
    %940 = vdwg.mxu0
    %v941 = vadd.f32 %v198, %v899
    %v942 = vadd.f32 %v239, %v939
    %v943 = vtanh.pop %v941
    %v944 = vtanh.pop %v942
    %s945 = scalar_lea.vmem [#allocation10], 1024
    %v946 = vld [vmem:[%s945] sm:$0xff]
    %v947 = vld [vmem:[%s945 + $0x8] sm:$0xff]
    %v948 = vld [vmem:[%s945 + $0x10] sm:$0xff]
    %v949 = vld [vmem:[%s945 + $0x18] sm:$0xff]
    %v950 = vld [vmem:[%s945 + $0x20] sm:$0xff]
    %v951 = vld [vmem:[%s945 + $0x28] sm:$0xff]
    %v952 = vld [vmem:[%s945 + $0x30] sm:$0xff]
    %v953 = vld [vmem:[%s945 + $0x38] sm:$0xff]
    %v954 = vld [vmem:[%s945 + $0x40] sm:$0xff]
    %v955 = vld [vmem:[%s945 + $0x48] sm:$0xff]
    %v956 = vld [vmem:[%s945 + $0x50] sm:$0xff]
    %v957 = vld [vmem:[%s945 + $0x58] sm:$0xff]
    %v958 = vld [vmem:[%s945 + $0x60] sm:$0xff]
    %v959 = vld [vmem:[%s945 + $0x68] sm:$0xff]
    %v960 = vld [vmem:[%s945 + $0x70] sm:$0xff]
    %v961 = vld [vmem:[%s945 + $0x78] sm:$0xff]
    %v962 = vld [vmem:[%s945 + $0x80] sm:$0xff]
    %v963 = vld [vmem:[%s945 + $0x88] sm:$0xff]
    %v964 = vld [vmem:[%s945 + $0x90] sm:$0xff]
    %v965 = vld [vmem:[%s945 + $0x98] sm:$0xff]
    %v966 = vld [vmem:[%s945 + $0xa0] sm:$0xff]
    %v967 = vld [vmem:[%s945 + $0xa8] sm:$0xff]
    %v968 = vld [vmem:[%s945 + $0xb0] sm:$0xff]
    %v969 = vld [vmem:[%s945 + $0xb8] sm:$0xff]
    %v970 = vld [vmem:[%s945 + $0xc0] sm:$0xff]
    %v971 = vld [vmem:[%s945 + $0xc8] sm:$0xff]
    %v972 = vld [vmem:[%s945 + $0xd0] sm:$0xff]
    %v973 = vld [vmem:[%s945 + $0xd8] sm:$0xff]
    %v974 = vld [vmem:[%s945 + $0xe0] sm:$0xff]
    %v975 = vld [vmem:[%s945 + $0xe8] sm:$0xff]
    %v976 = vld [vmem:[%s945 + $0xf0] sm:$0xff]
    %v977 = vld [vmem:[%s945 + $0xf8] sm:$0xff]
    %978 = vmatpush.msra.mxu0 %v961
    %979 = vmatpush.msra.mxu0 %v960
    %980 = vmatpush.msra.mxu0 %v959
    %981 = vmatpush.msra.mxu0 %v958
    %982 = vmatpush.msra.mxu0 %v957
    %983 = vmatpush.msra.mxu0 %v956
    %984 = vmatpush.msra.mxu0 %v955
    %985 = vmatpush.msra.mxu0 %v954
    %986 = vmatpush.msra.mxu0 %v953
    %987 = vmatpush.msra.mxu0 %v952
    %988 = vmatpush.msra.mxu0 %v951
    %989 = vmatpush.msra.mxu0 %v950
    %990 = vmatpush.msra.mxu0 %v949
    %991 = vmatpush.msra.mxu0 %v948
    %992 = vmatpush.msra.mxu0 %v947
    %993 = vmatpush.msra.mxu0 %v946
    %994 = vmatmul.f32.gmra.mxu0 %v943
    %v995 = vpop.f32.mrf.mxu0
    %v996 = vadd.f32 0.0, %v995
    %997 = vdwg.mxu0
    %998 = vmatpush.msra.mxu0 %v977
    %999 = vmatpush.msra.mxu0 %v976
    %1000 = vmatpush.msra.mxu0 %v975
    %1001 = vmatpush.msra.mxu0 %v974
    %1002 = vmatpush.msra.mxu0 %v973
    %1003 = vmatpush.msra.mxu0 %v972
    %1004 = vmatpush.msra.mxu0 %v971
    %1005 = vmatpush.msra.mxu0 %v970
    %1006 = vmatpush.msra.mxu0 %v969
    %1007 = vmatpush.msra.mxu0 %v968
    %1008 = vmatpush.msra.mxu0 %v967
    %1009 = vmatpush.msra.mxu0 %v966
    %1010 = vmatpush.msra.mxu0 %v965
    %1011 = vmatpush.msra.mxu0 %v964
    %1012 = vmatpush.msra.mxu0 %v963
    %1013 = vmatpush.msra.mxu0 %v962
    %1014 = vmatmul.f32.gmra.mxu0 %v944
    %v1015 = vpop.f32.mrf.mxu0
    %v1016 = vadd.f32 %v996, %v1015
    %1017 = vdwg.mxu0
    %v1018 = vadd.f32 %v860, %v1016
    %1019 = vmatpush.msra.mxu0 %v280
    %1020 = vmatpush.msra.mxu0 %v278
    %1021 = vmatpush.msra.mxu0 %v276
    %1022 = vmatpush.msra.mxu0 %v274
    %1023 = vmatpush.msra.mxu0 %v272
    %1024 = vmatpush.msra.mxu0 %v270
    %1025 = vmatpush.msra.mxu0 %v268
    %1026 = vmatpush.msra.mxu0 %v266
    %1027 = vmatpush.msra.mxu0 %v264
    %1028 = vmatpush.msra.mxu0 %v262
    %1029 = vmatpush.msra.mxu0 %v260
    %1030 = vmatpush.msra.mxu0 %v258
    %1031 = vmatpush.msra.mxu0 %v256
    %1032 = vmatpush.msra.mxu0 %v254
    %1033 = vmatpush.msra.mxu0 %v252
    %1034 = vmatpush.msra.mxu0 %v250
    %1035 = vmatmul.f32.gmra.mxu0 %v943
    %v1036 = vpop.f32.mrf.mxu0
    %v1037 = vadd.f32 0.0, %v1036
    %1038 = vdwg.mxu0
    %1039 = vmatpush.msra.mxu0 %v312
    %1040 = vmatpush.msra.mxu0 %v310
    %1041 = vmatpush.msra.mxu0 %v308
    %1042 = vmatpush.msra.mxu0 %v306
    %1043 = vmatpush.msra.mxu0 %v304
    %1044 = vmatpush.msra.mxu0 %v302
    %1045 = vmatpush.msra.mxu0 %v300
    %1046 = vmatpush.msra.mxu0 %v298
    %1047 = vmatpush.msra.mxu0 %v296
    %1048 = vmatpush.msra.mxu0 %v294
    %1049 = vmatpush.msra.mxu0 %v292
    %1050 = vmatpush.msra.mxu0 %v290
    %1051 = vmatpush.msra.mxu0 %v288
    %1052 = vmatpush.msra.mxu0 %v286
    %1053 = vmatpush.msra.mxu0 %v284
    %1054 = vmatpush.msra.mxu0 %v282
    %1055 = vmatmul.f32.gmra.mxu0 %v944
    %v1056 = vpop.f32.mrf.mxu0
    %v1057 = vadd.f32 %v1037, %v1056
    %1058 = vdwg.mxu0
    %1059 = vmatpush.msra.mxu0 %v281
    %1060 = vmatpush.msra.mxu0 %v279
    %1061 = vmatpush.msra.mxu0 %v277
    %1062 = vmatpush.msra.mxu0 %v275
    %1063 = vmatpush.msra.mxu0 %v273
    %1064 = vmatpush.msra.mxu0 %v271
    %1065 = vmatpush.msra.mxu0 %v269
    %1066 = vmatpush.msra.mxu0 %v267
    %1067 = vmatpush.msra.mxu0 %v265
    %1068 = vmatpush.msra.mxu0 %v263
    %1069 = vmatpush.msra.mxu0 %v261
    %1070 = vmatpush.msra.mxu0 %v259
    %1071 = vmatpush.msra.mxu0 %v257
    %1072 = vmatpush.msra.mxu0 %v255
    %1073 = vmatpush.msra.mxu0 %v253
    %1074 = vmatpush.msra.mxu0 %v251
    %1075 = vmatmul.f32.gmra.mxu0 %v943
    %v1076 = vpop.f32.mrf.mxu0
    %v1077 = vadd.f32 0.0, %v1076
    %1078 = vdwg.mxu0
    %1079 = vmatpush.msra.mxu0 %v313
    %1080 = vmatpush.msra.mxu0 %v311
    %1081 = vmatpush.msra.mxu0 %v309
    %1082 = vmatpush.msra.mxu0 %v307
    %1083 = vmatpush.msra.mxu0 %v305
    %1084 = vmatpush.msra.mxu0 %v303
    %1085 = vmatpush.msra.mxu0 %v301
    %1086 = vmatpush.msra.mxu0 %v299
    %1087 = vmatpush.msra.mxu0 %v297
    %1088 = vmatpush.msra.mxu0 %v295
    %1089 = vmatpush.msra.mxu0 %v293
    %1090 = vmatpush.msra.mxu0 %v291
    %1091 = vmatpush.msra.mxu0 %v289
    %1092 = vmatpush.msra.mxu0 %v287
    %1093 = vmatpush.msra.mxu0 %v285
    %1094 = vmatpush.msra.mxu0 %v283
    %1095 = vmatmul.f32.gmra.mxu0 %v944
    %v1096 = vpop.f32.mrf.mxu0
    %v1097 = vadd.f32 %v1077, %v1096
    %1098 = vdwg.mxu0
    %v1099 = vadd.f32 %v201, %v1057
    %v1100 = vadd.f32 %v242, %v1097
    %v1101 = vtanh.pop %v1099
    %v1102 = vtanh.pop %v1100
    %s1103 = scalar_lea.vmem [#allocation10], 1280
    %v1104 = vld [vmem:[%s1103] sm:$0xff]
    %v1105 = vld [vmem:[%s1103 + $0x8] sm:$0xff]
    %v1106 = vld [vmem:[%s1103 + $0x10] sm:$0xff]
    %v1107 = vld [vmem:[%s1103 + $0x18] sm:$0xff]
    %v1108 = vld [vmem:[%s1103 + $0x20] sm:$0xff]
    %v1109 = vld [vmem:[%s1103 + $0x28] sm:$0xff]
    %v1110 = vld [vmem:[%s1103 + $0x30] sm:$0xff]
    %v1111 = vld [vmem:[%s1103 + $0x38] sm:$0xff]
    %v1112 = vld [vmem:[%s1103 + $0x40] sm:$0xff]
    %v1113 = vld [vmem:[%s1103 + $0x48] sm:$0xff]
    %v1114 = vld [vmem:[%s1103 + $0x50] sm:$0xff]
    %v1115 = vld [vmem:[%s1103 + $0x58] sm:$0xff]
    %v1116 = vld [vmem:[%s1103 + $0x60] sm:$0xff]
    %v1117 = vld [vmem:[%s1103 + $0x68] sm:$0xff]
    %v1118 = vld [vmem:[%s1103 + $0x70] sm:$0xff]
    %v1119 = vld [vmem:[%s1103 + $0x78] sm:$0xff]
    %v1120 = vld [vmem:[%s1103 + $0x80] sm:$0xff]
    %v1121 = vld [vmem:[%s1103 + $0x88] sm:$0xff]
    %v1122 = vld [vmem:[%s1103 + $0x90] sm:$0xff]
    %v1123 = vld [vmem:[%s1103 + $0x98] sm:$0xff]
    %v1124 = vld [vmem:[%s1103 + $0xa0] sm:$0xff]
    %v1125 = vld [vmem:[%s1103 + $0xa8] sm:$0xff]
    %v1126 = vld [vmem:[%s1103 + $0xb0] sm:$0xff]
    %v1127 = vld [vmem:[%s1103 + $0xb8] sm:$0xff]
    %v1128 = vld [vmem:[%s1103 + $0xc0] sm:$0xff]
    %v1129 = vld [vmem:[%s1103 + $0xc8] sm:$0xff]
    %v1130 = vld [vmem:[%s1103 + $0xd0] sm:$0xff]
    %v1131 = vld [vmem:[%s1103 + $0xd8] sm:$0xff]
    %v1132 = vld [vmem:[%s1103 + $0xe0] sm:$0xff]
    %v1133 = vld [vmem:[%s1103 + $0xe8] sm:$0xff]
    %v1134 = vld [vmem:[%s1103 + $0xf0] sm:$0xff]
    %v1135 = vld [vmem:[%s1103 + $0xf8] sm:$0xff]
    %1136 = vmatpush.msra.mxu0 %v1119
    %1137 = vmatpush.msra.mxu0 %v1118
    %1138 = vmatpush.msra.mxu0 %v1117
    %1139 = vmatpush.msra.mxu0 %v1116
    %1140 = vmatpush.msra.mxu0 %v1115
    %1141 = vmatpush.msra.mxu0 %v1114
    %1142 = vmatpush.msra.mxu0 %v1113
    %1143 = vmatpush.msra.mxu0 %v1112
    %1144 = vmatpush.msra.mxu0 %v1111
    %1145 = vmatpush.msra.mxu0 %v1110
    %1146 = vmatpush.msra.mxu0 %v1109
    %1147 = vmatpush.msra.mxu0 %v1108
    %1148 = vmatpush.msra.mxu0 %v1107
    %1149 = vmatpush.msra.mxu0 %v1106
    %1150 = vmatpush.msra.mxu0 %v1105
    %1151 = vmatpush.msra.mxu0 %v1104
    %1152 = vmatmul.f32.gmra.mxu0 %v1101
    %v1153 = vpop.f32.mrf.mxu0
    %v1154 = vadd.f32 0.0, %v1153
    %1155 = vdwg.mxu0
    %1156 = vmatpush.msra.mxu0 %v1135
    %1157 = vmatpush.msra.mxu0 %v1134
    %1158 = vmatpush.msra.mxu0 %v1133
    %1159 = vmatpush.msra.mxu0 %v1132
    %1160 = vmatpush.msra.mxu0 %v1131
    %1161 = vmatpush.msra.mxu0 %v1130
    %1162 = vmatpush.msra.mxu0 %v1129
    %1163 = vmatpush.msra.mxu0 %v1128
    %1164 = vmatpush.msra.mxu0 %v1127
    %1165 = vmatpush.msra.mxu0 %v1126
    %1166 = vmatpush.msra.mxu0 %v1125
    %1167 = vmatpush.msra.mxu0 %v1124
    %1168 = vmatpush.msra.mxu0 %v1123
    %1169 = vmatpush.msra.mxu0 %v1122
    %1170 = vmatpush.msra.mxu0 %v1121
    %1171 = vmatpush.msra.mxu0 %v1120
    %1172 = vmatmul.f32.gmra.mxu0 %v1102
    %v1173 = vpop.f32.mrf.mxu0
    %v1174 = vadd.f32 %v1154, %v1173
    %1175 = vdwg.mxu0
    %v1176 = vadd.f32 %v1018, %v1174
    %1177 = vmatpush.msra.mxu0 %v280
    %1178 = vmatpush.msra.mxu0 %v278
    %1179 = vmatpush.msra.mxu0 %v276
    %1180 = vmatpush.msra.mxu0 %v274
    %1181 = vmatpush.msra.mxu0 %v272
    %1182 = vmatpush.msra.mxu0 %v270
    %1183 = vmatpush.msra.mxu0 %v268
    %1184 = vmatpush.msra.mxu0 %v266
    %1185 = vmatpush.msra.mxu0 %v264
    %1186 = vmatpush.msra.mxu0 %v262
    %1187 = vmatpush.msra.mxu0 %v260
    %1188 = vmatpush.msra.mxu0 %v258
    %1189 = vmatpush.msra.mxu0 %v256
    %1190 = vmatpush.msra.mxu0 %v254
    %1191 = vmatpush.msra.mxu0 %v252
    %1192 = vmatpush.msra.mxu0 %v250
    %1193 = vmatmul.f32.gmra.mxu0 %v1101
    %v1194 = vpop.f32.mrf.mxu0
    %v1195 = vadd.f32 0.0, %v1194
    %1196 = vdwg.mxu0
    %1197 = vmatpush.msra.mxu0 %v312
    %1198 = vmatpush.msra.mxu0 %v310
    %1199 = vmatpush.msra.mxu0 %v308
    %1200 = vmatpush.msra.mxu0 %v306
    %1201 = vmatpush.msra.mxu0 %v304
    %1202 = vmatpush.msra.mxu0 %v302
    %1203 = vmatpush.msra.mxu0 %v300
    %1204 = vmatpush.msra.mxu0 %v298
    %1205 = vmatpush.msra.mxu0 %v296
    %1206 = vmatpush.msra.mxu0 %v294
    %1207 = vmatpush.msra.mxu0 %v292
    %1208 = vmatpush.msra.mxu0 %v290
    %1209 = vmatpush.msra.mxu0 %v288
    %1210 = vmatpush.msra.mxu0 %v286
    %1211 = vmatpush.msra.mxu0 %v284
    %1212 = vmatpush.msra.mxu0 %v282
    %1213 = vmatmul.f32.gmra.mxu0 %v1102
    %v1214 = vpop.f32.mrf.mxu0
    %v1215 = vadd.f32 %v1195, %v1214
    %1216 = vdwg.mxu0
    %1217 = vmatpush.msra.mxu0 %v281
    %1218 = vmatpush.msra.mxu0 %v279
    %1219 = vmatpush.msra.mxu0 %v277
    %1220 = vmatpush.msra.mxu0 %v275
    %1221 = vmatpush.msra.mxu0 %v273
    %1222 = vmatpush.msra.mxu0 %v271
    %1223 = vmatpush.msra.mxu0 %v269
    %1224 = vmatpush.msra.mxu0 %v267
    %1225 = vmatpush.msra.mxu0 %v265
    %1226 = vmatpush.msra.mxu0 %v263
    %1227 = vmatpush.msra.mxu0 %v261
    %1228 = vmatpush.msra.mxu0 %v259
    %1229 = vmatpush.msra.mxu0 %v257
    %1230 = vmatpush.msra.mxu0 %v255
    %1231 = vmatpush.msra.mxu0 %v253
    %1232 = vmatpush.msra.mxu0 %v251
    %1233 = vmatmul.f32.gmra.mxu0 %v1101
    %v1234 = vpop.f32.mrf.mxu0
    %v1235 = vadd.f32 0.0, %v1234
    %1236 = vdwg.mxu0
    %1237 = vmatpush.msra.mxu0 %v313
    %1238 = vmatpush.msra.mxu0 %v311
    %1239 = vmatpush.msra.mxu0 %v309
    %1240 = vmatpush.msra.mxu0 %v307
    %1241 = vmatpush.msra.mxu0 %v305
    %1242 = vmatpush.msra.mxu0 %v303
    %1243 = vmatpush.msra.mxu0 %v301
    %1244 = vmatpush.msra.mxu0 %v299
    %1245 = vmatpush.msra.mxu0 %v297
    %1246 = vmatpush.msra.mxu0 %v295
    %1247 = vmatpush.msra.mxu0 %v293
    %1248 = vmatpush.msra.mxu0 %v291
    %1249 = vmatpush.msra.mxu0 %v289
    %1250 = vmatpush.msra.mxu0 %v287
    %1251 = vmatpush.msra.mxu0 %v285
    %1252 = vmatpush.msra.mxu0 %v283
    %1253 = vmatmul.f32.gmra.mxu0 %v1102
    %v1254 = vpop.f32.mrf.mxu0
    %v1255 = vadd.f32 %v1235, %v1254
    %1256 = vdwg.mxu0
    %v1257 = vadd.f32 %v204, %v1215
    %v1258 = vadd.f32 %v245, %v1255
    %v1259 = vtanh.pop %v1257
    %v1260 = vtanh.pop %v1258
    %s1261 = scalar_lea.vmem [#allocation10], 1536
    %v1262 = vld [vmem:[%s1261] sm:$0xff]
    %v1263 = vld [vmem:[%s1261 + $0x8] sm:$0xff]
    %v1264 = vld [vmem:[%s1261 + $0x10] sm:$0xff]
    %v1265 = vld [vmem:[%s1261 + $0x18] sm:$0xff]
    %v1266 = vld [vmem:[%s1261 + $0x20] sm:$0xff]
    %v1267 = vld [vmem:[%s1261 + $0x28] sm:$0xff]
    %v1268 = vld [vmem:[%s1261 + $0x30] sm:$0xff]
    %v1269 = vld [vmem:[%s1261 + $0x38] sm:$0xff]
    %v1270 = vld [vmem:[%s1261 + $0x40] sm:$0xff]
    %v1271 = vld [vmem:[%s1261 + $0x48] sm:$0xff]
    %v1272 = vld [vmem:[%s1261 + $0x50] sm:$0xff]
    %v1273 = vld [vmem:[%s1261 + $0x58] sm:$0xff]
    %v1274 = vld [vmem:[%s1261 + $0x60] sm:$0xff]
    %v1275 = vld [vmem:[%s1261 + $0x68] sm:$0xff]
    %v1276 = vld [vmem:[%s1261 + $0x70] sm:$0xff]
    %v1277 = vld [vmem:[%s1261 + $0x78] sm:$0xff]
    %v1278 = vld [vmem:[%s1261 + $0x80] sm:$0xff]
    %v1279 = vld [vmem:[%s1261 + $0x88] sm:$0xff]
    %v1280 = vld [vmem:[%s1261 + $0x90] sm:$0xff]
    %v1281 = vld [vmem:[%s1261 + $0x98] sm:$0xff]
    %v1282 = vld [vmem:[%s1261 + $0xa0] sm:$0xff]
    %v1283 = vld [vmem:[%s1261 + $0xa8] sm:$0xff]
    %v1284 = vld [vmem:[%s1261 + $0xb0] sm:$0xff]
    %v1285 = vld [vmem:[%s1261 + $0xb8] sm:$0xff]
    %v1286 = vld [vmem:[%s1261 + $0xc0] sm:$0xff]
    %v1287 = vld [vmem:[%s1261 + $0xc8] sm:$0xff]
    %v1288 = vld [vmem:[%s1261 + $0xd0] sm:$0xff]
    %v1289 = vld [vmem:[%s1261 + $0xd8] sm:$0xff]
    %v1290 = vld [vmem:[%s1261 + $0xe0] sm:$0xff]
    %v1291 = vld [vmem:[%s1261 + $0xe8] sm:$0xff]
    %v1292 = vld [vmem:[%s1261 + $0xf0] sm:$0xff]
    %v1293 = vld [vmem:[%s1261 + $0xf8] sm:$0xff]
    %1294 = vmatpush.msra.mxu0 %v1277
    %1295 = vmatpush.msra.mxu0 %v1276
    %1296 = vmatpush.msra.mxu0 %v1275
    %1297 = vmatpush.msra.mxu0 %v1274
    %1298 = vmatpush.msra.mxu0 %v1273
    %1299 = vmatpush.msra.mxu0 %v1272
    %1300 = vmatpush.msra.mxu0 %v1271
    %1301 = vmatpush.msra.mxu0 %v1270
    %1302 = vmatpush.msra.mxu0 %v1269
    %1303 = vmatpush.msra.mxu0 %v1268
    %1304 = vmatpush.msra.mxu0 %v1267
    %1305 = vmatpush.msra.mxu0 %v1266
    %1306 = vmatpush.msra.mxu0 %v1265
    %1307 = vmatpush.msra.mxu0 %v1264
    %1308 = vmatpush.msra.mxu0 %v1263
    %1309 = vmatpush.msra.mxu0 %v1262
    %1310 = vmatmul.f32.gmra.mxu0 %v1259
    %v1311 = vpop.f32.mrf.mxu0
    %v1312 = vadd.f32 0.0, %v1311
    %1313 = vdwg.mxu0
    %1314 = vmatpush.msra.mxu0 %v1293
    %1315 = vmatpush.msra.mxu0 %v1292
    %1316 = vmatpush.msra.mxu0 %v1291
    %1317 = vmatpush.msra.mxu0 %v1290
    %1318 = vmatpush.msra.mxu0 %v1289
    %1319 = vmatpush.msra.mxu0 %v1288
    %1320 = vmatpush.msra.mxu0 %v1287
    %1321 = vmatpush.msra.mxu0 %v1286
    %1322 = vmatpush.msra.mxu0 %v1285
    %1323 = vmatpush.msra.mxu0 %v1284
    %1324 = vmatpush.msra.mxu0 %v1283
    %1325 = vmatpush.msra.mxu0 %v1282
    %1326 = vmatpush.msra.mxu0 %v1281
    %1327 = vmatpush.msra.mxu0 %v1280
    %1328 = vmatpush.msra.mxu0 %v1279
    %1329 = vmatpush.msra.mxu0 %v1278
    %1330 = vmatmul.f32.gmra.mxu0 %v1260
    %v1331 = vpop.f32.mrf.mxu0
    %v1332 = vadd.f32 %v1312, %v1331
    %1333 = vdwg.mxu0
    %v1334 = vadd.f32 %v1176, %v1332
    %1335 = vmatpush.msra.mxu0 %v280
    %1336 = vmatpush.msra.mxu0 %v278
    %1337 = vmatpush.msra.mxu0 %v276
    %1338 = vmatpush.msra.mxu0 %v274
    %1339 = vmatpush.msra.mxu0 %v272
    %1340 = vmatpush.msra.mxu0 %v270
    %1341 = vmatpush.msra.mxu0 %v268
    %1342 = vmatpush.msra.mxu0 %v266
    %1343 = vmatpush.msra.mxu0 %v264
    %1344 = vmatpush.msra.mxu0 %v262
    %1345 = vmatpush.msra.mxu0 %v260
    %1346 = vmatpush.msra.mxu0 %v258
    %1347 = vmatpush.msra.mxu0 %v256
    %1348 = vmatpush.msra.mxu0 %v254
    %1349 = vmatpush.msra.mxu0 %v252
    %1350 = vmatpush.msra.mxu0 %v250
    %1351 = vmatmul.f32.gmra.mxu0 %v1259
    %v1352 = vpop.f32.mrf.mxu0
    %v1353 = vadd.f32 0.0, %v1352
    %1354 = vdwg.mxu0
    %1355 = vmatpush.msra.mxu0 %v312
    %1356 = vmatpush.msra.mxu0 %v310
    %1357 = vmatpush.msra.mxu0 %v308
    %1358 = vmatpush.msra.mxu0 %v306
    %1359 = vmatpush.msra.mxu0 %v304
    %1360 = vmatpush.msra.mxu0 %v302
    %1361 = vmatpush.msra.mxu0 %v300
    %1362 = vmatpush.msra.mxu0 %v298
    %1363 = vmatpush.msra.mxu0 %v296
    %1364 = vmatpush.msra.mxu0 %v294
    %1365 = vmatpush.msra.mxu0 %v292
    %1366 = vmatpush.msra.mxu0 %v290
    %1367 = vmatpush.msra.mxu0 %v288
    %1368 = vmatpush.msra.mxu0 %v286
    %1369 = vmatpush.msra.mxu0 %v284
    %1370 = vmatpush.msra.mxu0 %v282
    %1371 = vmatmul.f32.gmra.mxu0 %v1260
    %v1372 = vpop.f32.mrf.mxu0
    %v1373 = vadd.f32 %v1353, %v1372
    %1374 = vdwg.mxu0
    %1375 = vmatpush.msra.mxu0 %v281
    %1376 = vmatpush.msra.mxu0 %v279
    %1377 = vmatpush.msra.mxu0 %v277
    %1378 = vmatpush.msra.mxu0 %v275
    %1379 = vmatpush.msra.mxu0 %v273
    %1380 = vmatpush.msra.mxu0 %v271
    %1381 = vmatpush.msra.mxu0 %v269
    %1382 = vmatpush.msra.mxu0 %v267
    %1383 = vmatpush.msra.mxu0 %v265
    %1384 = vmatpush.msra.mxu0 %v263
    %1385 = vmatpush.msra.mxu0 %v261
    %1386 = vmatpush.msra.mxu0 %v259
    %1387 = vmatpush.msra.mxu0 %v257
    %1388 = vmatpush.msra.mxu0 %v255
    %1389 = vmatpush.msra.mxu0 %v253
    %1390 = vmatpush.msra.mxu0 %v251
    %1391 = vmatmul.f32.gmra.mxu0 %v1259
    %v1392 = vpop.f32.mrf.mxu0
    %v1393 = vadd.f32 0.0, %v1392
    %1394 = vdwg.mxu0
    %1395 = vmatpush.msra.mxu0 %v313
    %1396 = vmatpush.msra.mxu0 %v311
    %1397 = vmatpush.msra.mxu0 %v309
    %1398 = vmatpush.msra.mxu0 %v307
    %1399 = vmatpush.msra.mxu0 %v305
    %1400 = vmatpush.msra.mxu0 %v303
    %1401 = vmatpush.msra.mxu0 %v301
    %1402 = vmatpush.msra.mxu0 %v299
    %1403 = vmatpush.msra.mxu0 %v297
    %1404 = vmatpush.msra.mxu0 %v295
    %1405 = vmatpush.msra.mxu0 %v293
    %1406 = vmatpush.msra.mxu0 %v291
    %1407 = vmatpush.msra.mxu0 %v289
    %1408 = vmatpush.msra.mxu0 %v287
    %1409 = vmatpush.msra.mxu0 %v285
    %1410 = vmatpush.msra.mxu0 %v283
    %1411 = vmatmul.f32.gmra.mxu0 %v1260
    %v1412 = vpop.f32.mrf.mxu0
    %v1413 = vadd.f32 %v1393, %v1412
    %1414 = vdwg.mxu0
    %v1415 = vadd.f32 %v207, %v1373
    %v1416 = vadd.f32 %v248, %v1413
    %v1417 = vtanh.pop %v1415
    %v1418 = vtanh.pop %v1416
    %s1419 = scalar_lea.vmem [#allocation10], 1792
    %v1420 = vld [vmem:[%s1419] sm:$0xff]
    %v1421 = vld [vmem:[%s1419 + $0x8] sm:$0xff]
    %v1422 = vld [vmem:[%s1419 + $0x10] sm:$0xff]
    %v1423 = vld [vmem:[%s1419 + $0x18] sm:$0xff]
    %v1424 = vld [vmem:[%s1419 + $0x20] sm:$0xff]
    %v1425 = vld [vmem:[%s1419 + $0x28] sm:$0xff]
    %v1426 = vld [vmem:[%s1419 + $0x30] sm:$0xff]
    %v1427 = vld [vmem:[%s1419 + $0x38] sm:$0xff]
    %v1428 = vld [vmem:[%s1419 + $0x40] sm:$0xff]
    %v1429 = vld [vmem:[%s1419 + $0x48] sm:$0xff]
    %v1430 = vld [vmem:[%s1419 + $0x50] sm:$0xff]
    %v1431 = vld [vmem:[%s1419 + $0x58] sm:$0xff]
    %v1432 = vld [vmem:[%s1419 + $0x60] sm:$0xff]
    %v1433 = vld [vmem:[%s1419 + $0x68] sm:$0xff]
    %v1434 = vld [vmem:[%s1419 + $0x70] sm:$0xff]
    %v1435 = vld [vmem:[%s1419 + $0x78] sm:$0xff]
    %v1436 = vld [vmem:[%s1419 + $0x80] sm:$0xff]
    %v1437 = vld [vmem:[%s1419 + $0x88] sm:$0xff]
    %v1438 = vld [vmem:[%s1419 + $0x90] sm:$0xff]
    %v1439 = vld [vmem:[%s1419 + $0x98] sm:$0xff]
    %v1440 = vld [vmem:[%s1419 + $0xa0] sm:$0xff]
    %v1441 = vld [vmem:[%s1419 + $0xa8] sm:$0xff]
    %v1442 = vld [vmem:[%s1419 + $0xb0] sm:$0xff]
    %v1443 = vld [vmem:[%s1419 + $0xb8] sm:$0xff]
    %v1444 = vld [vmem:[%s1419 + $0xc0] sm:$0xff]
    %v1445 = vld [vmem:[%s1419 + $0xc8] sm:$0xff]
    %v1446 = vld [vmem:[%s1419 + $0xd0] sm:$0xff]
    %v1447 = vld [vmem:[%s1419 + $0xd8] sm:$0xff]
    %v1448 = vld [vmem:[%s1419 + $0xe0] sm:$0xff]
    %v1449 = vld [vmem:[%s1419 + $0xe8] sm:$0xff]
    %v1450 = vld [vmem:[%s1419 + $0xf0] sm:$0xff]
    %v1451 = vld [vmem:[%s1419 + $0xf8] sm:$0xff]
    %1452 = vmatpush.msra.mxu0 %v1435
    %1453 = vmatpush.msra.mxu0 %v1434
    %1454 = vmatpush.msra.mxu0 %v1433
    %1455 = vmatpush.msra.mxu0 %v1432
    %1456 = vmatpush.msra.mxu0 %v1431
    %1457 = vmatpush.msra.mxu0 %v1430
    %1458 = vmatpush.msra.mxu0 %v1429
    %1459 = vmatpush.msra.mxu0 %v1428
    %1460 = vmatpush.msra.mxu0 %v1427
    %1461 = vmatpush.msra.mxu0 %v1426
    %1462 = vmatpush.msra.mxu0 %v1425
    %1463 = vmatpush.msra.mxu0 %v1424
    %1464 = vmatpush.msra.mxu0 %v1423
    %1465 = vmatpush.msra.mxu0 %v1422
    %1466 = vmatpush.msra.mxu0 %v1421
    %1467 = vmatpush.msra.mxu0 %v1420
    %1468 = vmatmul.f32.gmra.mxu0 %v1417
    %v1469 = vpop.f32.mrf.mxu0
    %v1470 = vadd.f32 0.0, %v1469
    %1471 = vdwg.mxu0
    %1472 = vmatpush.msra.mxu0 %v1451
    %1473 = vmatpush.msra.mxu0 %v1450
    %1474 = vmatpush.msra.mxu0 %v1449
    %1475 = vmatpush.msra.mxu0 %v1448
    %1476 = vmatpush.msra.mxu0 %v1447
    %1477 = vmatpush.msra.mxu0 %v1446
    %1478 = vmatpush.msra.mxu0 %v1445
    %1479 = vmatpush.msra.mxu0 %v1444
    %1480 = vmatpush.msra.mxu0 %v1443
    %1481 = vmatpush.msra.mxu0 %v1442
    %1482 = vmatpush.msra.mxu0 %v1441
    %1483 = vmatpush.msra.mxu0 %v1440
    %1484 = vmatpush.msra.mxu0 %v1439
    %1485 = vmatpush.msra.mxu0 %v1438
    %1486 = vmatpush.msra.mxu0 %v1437
    %1487 = vmatpush.msra.mxu0 %v1436
    %1488 = vmatmul.f32.gmra.mxu0 %v1418
    %v1489 = vpop.f32.mrf.mxu0
    %v1490 = vadd.f32 %v1470, %v1489
    %1491 = vdwg.mxu0
    %v1492 = vadd.f32 %v1334, %v1490
    %v1493 = vld [vmem:[%s5] sm:$0x1]
    %v1495 = vperm.slane %v1493, 0
    %v1497 = vadd.f32 %v1492, %v1495
    %v1498 = vtanh.pop %v1497
    %v1499 = vld [vmem:[#allocation11] sm:$0xff]
    %v1500 = vld [vmem:[#allocation11 + $0x8] sm:$0xff]
    %v1501 = vld [vmem:[#allocation11 + $0x10] sm:$0xff]
    %v1502 = vld [vmem:[#allocation11 + $0x18] sm:$0xff]
    %v1503 = vld [vmem:[#allocation11 + $0x20] sm:$0xff]
    %v1504 = vld [vmem:[#allocation11 + $0x28] sm:$0xff]
    %v1505 = vld [vmem:[#allocation11 + $0x30] sm:$0xff]
    %v1506 = vld [vmem:[#allocation11 + $0x38] sm:$0xff]
    %v1507 = vld [vmem:[#allocation11 + $0x40] sm:$0xff]
    %v1508 = vld [vmem:[#allocation11 + $0x48] sm:$0xff]
    %v1509 = vld [vmem:[#allocation11 + $0x50] sm:$0xff]
    %v1510 = vld [vmem:[#allocation11 + $0x58] sm:$0xff]
    %v1511 = vld [vmem:[#allocation11 + $0x60] sm:$0xff]
    %v1512 = vld [vmem:[#allocation11 + $0x68] sm:$0xff]
    %v1513 = vld [vmem:[#allocation11 + $0x70] sm:$0xff]
    %v1514 = vld [vmem:[#allocation11 + $0x78] sm:$0xff]
    %v1515 = vld [vmem:[%s7] sm:$0x1]
    %v1517 = vperm.slane %v1515, 0
    %1519 = vmatpush.msra.mxu0 %v1514
    %1520 = vmatpush.msra.mxu0 %v1513
    %1521 = vmatpush.msra.mxu0 %v1512
    %1522 = vmatpush.msra.mxu0 %v1511
    %1523 = vmatpush.msra.mxu0 %v1510
    %1524 = vmatpush.msra.mxu0 %v1509
    %1525 = vmatpush.msra.mxu0 %v1508
    %1526 = vmatpush.msra.mxu0 %v1507
    %1527 = vmatpush.msra.mxu0 %v1506
    %1528 = vmatpush.msra.mxu0 %v1505
    %1529 = vmatpush.msra.mxu0 %v1504
    %1530 = vmatpush.msra.mxu0 %v1503
    %1531 = vmatpush.msra.mxu0 %v1502
    %1532 = vmatpush.msra.mxu0 %v1501
    %1533 = vmatpush.msra.mxu0 %v1500
    %1534 = vmatpush.msra.mxu0 %v1499
    %1535 = vmatmul.f32.gmra.mxu0 %v1498
    %v1536 = vpop.f32.mrf.mxu0
    %v1537 = vadd.f32 %v1517, %v1536
    %1538 = vdwg.mxu0
    %1539 = vst [vmem:[#allocation13] sm:$0xff] %v1537
    // Predicated region
    $region58: #{tpu_custom_call.1} parent=1 // pred_check
      _
    $region59: #{tpu_custom_call.1} parent=1 // pred_check_branch
      %1541 = sbr.rel (0) target = $region61
    $region60: #{tpu_custom_call.1} parent=1 // pred_region
      %1543 = vsyncadd [#allocation4], 0
      %s1545 = sshll.u32 [#allocation13], 4
      %s1546 = int_to_ptr.vmem [resolvable:$true] %s1545
      %s1547 = sshll.u32 %s8, 4
      %s1548 = int_to_ptr.hbm [resolvable:$true] %s1547
      %1550 = dma.vmem_to_hbm [thread:$0]  %s1546, 128, %s1548, [#allocation4]
    $region61: #{tpu_custom_call.1} parent=1 // pred_fallthru
      _
    // Predicated region
    $region62: #{tpu_custom_call.1} parent=1 // pred_check
      _
    $region63: #{tpu_custom_call.1} parent=1 // pred_check_branch
      %1552 = sbr.rel (0) target = $region65
    $region64: #{tpu_custom_call.1} parent=1 // pred_region
      %1554 = dma.done [#allocation4], 128
    $region65: #{tpu_custom_call.1} parent=1 // pred_fallthru
      _
    %1555 = vsyncpa [#allocation3], 1
    %1556 = vsyncpa [#allocation6], 1
    %1557 = vsyncpa [#allocation9], 1
    %1558 = vsyncpa [#allocation12], 1
    %1559 = vsyncpa [#allocation4], 1

</llo_original>
